<compile_context>
chip_gen: v6e
topology: v6e:2x2x1
jax: 0.10.0
libtpu: 0.0.40
codegen_flags: <defaults>
</compile_context>

<pallas_src>
import functools

import jax
import jax.numpy as jnp
from jax.experimental import pallas as pl
from jax.experimental.pallas import tpu as pltpu

DIM = 256          # `dim` of the autoencoder
H1 = 512
H2 = 128
TB_MAX = 512       # batch-tile cap: safe inside v5e's 16 MiB scoped-VMEM default,
                   # large enough that per-step overhead is well amortized on
                   # v6e/v7x as well.


def _prelu(h, alpha):
    return jnp.where(h >= 0, h, alpha * h)


def ae_kernel(alpha_ref,                       # SMEM (4,) f32 : PReLU alphas
              x_ref,                           # VMEM (tb, DIM)   f32 (native)
              w1_ref, b1_ref,                  # (DIM, 512) bf16, (1, 512) f32
              w2_ref, b2_ref,                  # (512, 128) bf16, (1, 128) f32
              w3_ref, b3_ref,                  # (128, 512) bf16, (1, 512) f32
              w4_ref, b4_ref,                  # (512, DIM) bf16, (1, DIM) f32
              out_ref,                         # VMEM (tb, DIM)
              z_ref):                          # VMEM (tb, 128)
    # Read each PReLU alpha once from SMEM into a scalar local.
    a1 = alpha_ref[0]
    a2 = alpha_ref[1]
    a3 = alpha_ref[2]
    a4 = alpha_ref[3]

    # x arrives in its native dtype; cast to bf16 on the VPU right before the
    # MXU matmul (no separate wrapper-side cast pass over HBM).
    x = x_ref[...].astype(jnp.bfloat16)

    # Layer 1: dim -> 512   (bf16 MXU matmul, f32 accumulate + epilogue)
    h1 = jnp.dot(x, w1_ref[...], preferred_element_type=jnp.float32)
    h1 = _prelu(h1 + b1_ref[...], a1)

    # Layer 2: 512 -> 128
    z = jnp.dot(h1.astype(jnp.bfloat16), w2_ref[...],
                preferred_element_type=jnp.float32)
    z = _prelu(z + b2_ref[...], a2)

    # Layer 3: 128 -> 512
    h3 = jnp.dot(z.astype(jnp.bfloat16), w3_ref[...],
                 preferred_element_type=jnp.float32)
    h3 = _prelu(h3 + b3_ref[...], a3)

    # Layer 4: 512 -> dim
    y = jnp.dot(h3.astype(jnp.bfloat16), w4_ref[...],
                preferred_element_type=jnp.float32)
    y = _prelu(y + b4_ref[...], a4)

    z_ref[...] = z.astype(z_ref.dtype)
    out_ref[...] = y.astype(out_ref.dtype)


def _round_up(n, m):
    return ((n + m - 1) // m) * m


def _pick_batch_tile(batch):
    """Batch tile: at most TB_MAX; for batch > 16 split so the grid has at
    least 2 steps (both v7x TensorCores get work) and round to a multiple of
    16 (bf16 sublane tile for the intermediate activations)."""
    if batch <= 16:
        return batch            # equals the full array dim -> always legal
    return min(TB_MAX, _round_up(pl.cdiv(batch, 2), 16))


def prepare_params(params):
    """One-time dtype conversion of the parameters to their kernel dtypes:
    bf16 weights (full-rate MXU, half the DMA bytes), f32 biases / alphas
    for the f32 epilogue.  Call once; ae_forward never re-casts."""
    (alphas, w1, b1, w2, b2, w3, b3, w4, b4) = params
    bf, f32 = jnp.bfloat16, jnp.float32
    return (alphas.astype(f32),
            w1.astype(bf), b1.astype(f32),
            w2.astype(bf), b2.astype(f32),
            w3.astype(bf), b3.astype(f32),
            w4.astype(bf), b4.astype(f32))


@functools.partial(jax.jit, static_argnames=("dim",))
def ae_forward(x, params, dim=DIM):
    """Returns (decoded, z), mirroring AE.forward.

    `params` should come from prepare_params() (bf16 weights, f32 biases /
    alphas) so no per-call cast passes are issued.
    """
    (alphas, w1, b1, w2, b2, w3, b3, w4, b4) = params
    out_dtype = x.dtype

    x2d = x.reshape(-1, dim)                   # x.view(-1, self.dim)
    batch = x2d.shape[0]

    tb = _pick_batch_tile(batch)
    grid = (pl.cdiv(batch, tb),)               # no padding: the partial last
                                               # block is store-masked by Pallas

    full = lambda i: (0, 0)                    # weights/biases: whole array each step
    row = lambda i: (i, 0)                     # batch-tiled arrays

    out_dec, out_z = pl.pallas_call(
        ae_kernel,
        out_shape=(
            jax.ShapeDtypeStruct((batch, dim), out_dtype),
            jax.ShapeDtypeStruct((batch, H2), out_dtype),
        ),
        grid_spec=pl.GridSpec(
            grid=grid,
            in_specs=[
                pl.BlockSpec(memory_space=pltpu.SMEM),      # alphas
                pl.BlockSpec((tb, dim), row),               # x tile (native dtype)
                # Grid-invariant weights/biases stay resident in VMEM.
                # TODO(synk): pipeline_mode=pl.Buffered(1) here would drop the
                # redundant second buffer (~0.75 MB) for these invariant blocks.
                pl.BlockSpec((dim, H1), full), pl.BlockSpec((1, H1), full),
                pl.BlockSpec((H1, H2), full), pl.BlockSpec((1, H2), full),
                pl.BlockSpec((H2, H1), full), pl.BlockSpec((1, H1), full),
                pl.BlockSpec((H1, dim), full), pl.BlockSpec((1, dim), full),
            ],
            out_specs=[
                pl.BlockSpec((tb, dim), row),
                pl.BlockSpec((tb, H2), row),
            ],
        ),
        compiler_params=pltpu.CompilerParams(
            dimension_semantics=("parallel",),   # batch tiles split across TCs (v7x)
        ),
    )(alphas, x2d, w1, b1, w2, b2, w3, b3, w4, b4)

    return out_dec, out_z


def init_params(key, dim=DIM, dtype=jnp.float32):
    """Deterministic parameter init (shapes match the PyTorch module).

    Weights are stored already transposed, i.e. W has shape (in, out) so the
    kernel computes x @ W + b  ==  PyTorch's x @ W_pt.T + b.
    """
    ks = jax.random.split(key, 8)

    def lin(kw, kb, fan_in, fan_out):
        bound = 1.0 / jnp.sqrt(fan_in)
        w = jax.random.uniform(kw, (fan_in, fan_out), dtype, -bound, bound)
        b = jax.random.uniform(kb, (1, fan_out), dtype, -bound, bound)
        return w, b

    w1, b1 = lin(ks[0], ks[1], dim, H1)
    w2, b2 = lin(ks[2], ks[3], H1, H2)
    w3, b3 = lin(ks[4], ks[5], H2, H1)
    w4, b4 = lin(ks[6], ks[7], H1, dim)
    alphas = jnp.full((4,), 0.25, dtype=jnp.float32)   # nn.PReLU() default init
    return (alphas, w1, b1, w2, b2, w3, b3, w4, b4)


def ae_forward_ref(x, params, dim=DIM):
    """Pure-JAX reference in matching precision (bf16 matmul inputs, f32 accum)."""
    (alphas, w1, b1, w2, b2, w3, b3, w4, b4) = params
    bf = jnp.bfloat16

    def layer(h, w, b, a):
        o = jnp.dot(h.astype(bf), w.astype(bf),
                    preferred_element_type=jnp.float32) + b.astype(jnp.float32)
        return _prelu(o, a)

    x2d = x.reshape(-1, dim)
    h1 = layer(x2d, w1, b1, alphas[0])
    z = layer(h1, w2, b2, alphas[1])
    h3 = layer(z, w3, b3, alphas[2])
    y = layer(h3, w4, b4, alphas[3])
    return y.astype(x.dtype), z.astype(x.dtype)


if __name__ == "__main__":
    key = jax.random.PRNGKey(0)
    kx, kx2, kp = jax.random.split(key, 3)

    params_f32 = init_params(kp)
    params = prepare_params(params_f32)        # one-time dtype conversion

    # Input with extra leading dims; forward flattens to (-1, dim).
    x = jax.random.normal(kx, (2, 8, DIM), dtype=jnp.float32)   # -> (16, 256)
    dec, z = ae_forward(x, params)
    jax.block_until_ready((dec, z))

    dec_ref, z_ref = ae_forward_ref(x, params_f32)
    assert dec.shape == (16, DIM) and z.shape == (16, H2)
    assert jnp.allclose(dec, dec_ref, atol=2e-2, rtol=2e-2)
    assert jnp.allclose(z, z_ref, atol=2e-2, rtol=2e-2)

    # Ragged batch with NO padding: tile=160, grid=2 (second block partial and
    # store-masked) -- exercises the ragged path and a 2-step parallel grid
    # (both v7x TensorCores).
    x2 = jax.random.normal(kx2, (300, DIM), dtype=jnp.float32)
    dec2, z2 = ae_forward(x2, params)
    jax.block_until_ready((dec2, z2))

    dec2_ref, z2_ref = ae_forward_ref(x2, params_f32)
    assert dec2.shape == (300, DIM) and z2.shape == (300, H2)
    assert jnp.allclose(dec2, dec2_ref, atol=2e-2, rtol=2e-2)
    assert jnp.allclose(z2, z2_ref, atol=2e-2, rtol=2e-2)

    print("KERNEL_OK")
</pallas_src>

<mosaic_0001>
module attributes {stable_mosaic.version = 11 : i64} {
  func.func @ae_kernel(%arg0: i32, %arg1: memref<4xf32, #tpu.memory_space<smem>>, %arg2: memref<16x256xf32, #tpu.memory_space<vmem>>, %arg3: memref<256x512xbf16, #tpu.memory_space<vmem>>, %arg4: memref<1x512xf32, #tpu.memory_space<vmem>>, %arg5: memref<512x128xbf16, #tpu.memory_space<vmem>>, %arg6: memref<1x128xf32, #tpu.memory_space<vmem>>, %arg7: memref<128x512xbf16, #tpu.memory_space<vmem>>, %arg8: memref<1x512xf32, #tpu.memory_space<vmem>>, %arg9: memref<512x256xbf16, #tpu.memory_space<vmem>>, %arg10: memref<1x256xf32, #tpu.memory_space<vmem>>, %arg11: memref<16x256xf32, #tpu.memory_space<vmem>>, %arg12: memref<16x128xf32, #tpu.memory_space<vmem>>) attributes {dimension_semantics = [#tpu.dimension_semantics<parallel>], iteration_bounds = array<i64: 1>, scalar_prefetch = 0 : i64, scratch_operands = 0 : i64, tpu.core_type = #tpu.core_type<tc>, window_params = [{transform_indices = @transform_0, window_bounds = array<i64: 4>}, {transform_indices = @transform_1, window_bounds = array<i64: 16, 256>}, {pipeline_mode = #tpu.pipeline_mode<synchronous>, transform_indices = @transform_2, window_bounds = array<i64: 256, 512>}, {pipeline_mode = #tpu.pipeline_mode<synchronous>, transform_indices = @transform_3, window_bounds = array<i64: 1, 512>}, {pipeline_mode = #tpu.pipeline_mode<synchronous>, transform_indices = @transform_4, window_bounds = array<i64: 512, 128>}, {pipeline_mode = #tpu.pipeline_mode<synchronous>, transform_indices = @transform_5, window_bounds = array<i64: 1, 128>}, {pipeline_mode = #tpu.pipeline_mode<synchronous>, transform_indices = @transform_6, window_bounds = array<i64: 128, 512>}, {pipeline_mode = #tpu.pipeline_mode<synchronous>, transform_indices = @transform_7, window_bounds = array<i64: 1, 512>}, {pipeline_mode = #tpu.pipeline_mode<synchronous>, transform_indices = @transform_8, window_bounds = array<i64: 512, 256>}, {pipeline_mode = #tpu.pipeline_mode<synchronous>, transform_indices = @transform_9, window_bounds = array<i64: 1, 256>}, {transform_indices = @transform_10, window_bounds = array<i64: 16, 256>}, {transform_indices = @transform_11, window_bounds = array<i64: 16, 128>}]} {
    %c0 = arith.constant 0 : index
    %0 = memref.load %arg1[%c0] : memref<4xf32, #tpu.memory_space<smem>>
    %c1 = arith.constant 1 : index
    %1 = memref.load %arg1[%c1] : memref<4xf32, #tpu.memory_space<smem>>
    %c2 = arith.constant 2 : index
    %2 = memref.load %arg1[%c2] : memref<4xf32, #tpu.memory_space<smem>>
    %c3 = arith.constant 3 : index
    %3 = memref.load %arg1[%c3] : memref<4xf32, #tpu.memory_space<smem>>
    %c0_0 = arith.constant 0 : index
    %c0_1 = arith.constant 0 : index
    %4 = vector.load %arg2[%c0_0, %c0_1] : memref<16x256xf32, #tpu.memory_space<vmem>>, vector<16x256xf32>
    %5 = arith.truncf %4 : vector<16x256xf32> to vector<16x256xbf16>
    %c0_2 = arith.constant 0 : index
    %c0_3 = arith.constant 0 : index
    %6 = vector.load %arg3[%c0_2, %c0_3] : memref<256x512xbf16, #tpu.memory_space<vmem>>, vector<256x512xbf16>
    %cst = arith.constant dense<0.000000e+00> : vector<16x512xf32>
    %7 = tpu.matmul %5, %6, %cst {dimension_numbers = #tpu.dot_dimension_numbers<[1], [0], [0], [1], [0, 0, 1, 1], [], []>} : vector<16x256xbf16>, vector<256x512xbf16>, vector<16x512xf32> -> vector<16x512xf32>
    %c0_4 = arith.constant 0 : index
    %c0_5 = arith.constant 0 : index
    %8 = vector.load %arg4[%c0_4, %c0_5] : memref<1x512xf32, #tpu.memory_space<vmem>>, vector<1x512xf32>
    %9 = vector.broadcast %8 : vector<1x512xf32> to vector<16x512xf32>
    %10 = arith.addf %7, %9 : vector<16x512xf32>
    %cst_6 = arith.constant 0.000000e+00 : f32
    %11 = vector.broadcast %cst_6 : f32 to vector<16x512xf32>
    %12 = arith.cmpf oge, %10, %11 : vector<16x512xf32>
    %13 = vector.broadcast %0 : f32 to vector<16x512xf32>
    %14 = arith.mulf %13, %10 : vector<16x512xf32>
    %15 = arith.select %12, %10, %14 : vector<16x512xi1>, vector<16x512xf32>
    %16 = arith.truncf %15 : vector<16x512xf32> to vector<16x512xbf16>
    %c0_7 = arith.constant 0 : index
    %c0_8 = arith.constant 0 : index
    %17 = vector.load %arg5[%c0_7, %c0_8] : memref<512x128xbf16, #tpu.memory_space<vmem>>, vector<512x128xbf16>
    %cst_9 = arith.constant dense<0.000000e+00> : vector<16x128xf32>
    %18 = tpu.matmul %16, %17, %cst_9 {dimension_numbers = #tpu.dot_dimension_numbers<[1], [0], [0], [1], [0, 0, 1, 1], [], []>} : vector<16x512xbf16>, vector<512x128xbf16>, vector<16x128xf32> -> vector<16x128xf32>
    %c0_10 = arith.constant 0 : index
    %c0_11 = arith.constant 0 : index
    %19 = vector.load %arg6[%c0_10, %c0_11] : memref<1x128xf32, #tpu.memory_space<vmem>>, vector<1x128xf32>
    %20 = vector.broadcast %19 : vector<1x128xf32> to vector<16x128xf32>
    %21 = arith.addf %18, %20 : vector<16x128xf32>
    %cst_12 = arith.constant 0.000000e+00 : f32
    %22 = vector.broadcast %cst_12 : f32 to vector<16x128xf32>
    %23 = arith.cmpf oge, %21, %22 : vector<16x128xf32>
    %24 = vector.broadcast %1 : f32 to vector<16x128xf32>
    %25 = arith.mulf %24, %21 : vector<16x128xf32>
    %26 = arith.select %23, %21, %25 : vector<16x128xi1>, vector<16x128xf32>
    %27 = arith.truncf %26 : vector<16x128xf32> to vector<16x128xbf16>
    %c0_13 = arith.constant 0 : index
    %c0_14 = arith.constant 0 : index
    %28 = vector.load %arg7[%c0_13, %c0_14] : memref<128x512xbf16, #tpu.memory_space<vmem>>, vector<128x512xbf16>
    %cst_15 = arith.constant dense<0.000000e+00> : vector<16x512xf32>
    %29 = tpu.matmul %27, %28, %cst_15 {dimension_numbers = #tpu.dot_dimension_numbers<[1], [0], [0], [1], [0, 0, 1, 1], [], []>} : vector<16x128xbf16>, vector<128x512xbf16>, vector<16x512xf32> -> vector<16x512xf32>
    %c0_16 = arith.constant 0 : index
    %c0_17 = arith.constant 0 : index
    %30 = vector.load %arg8[%c0_16, %c0_17] : memref<1x512xf32, #tpu.memory_space<vmem>>, vector<1x512xf32>
    %31 = vector.broadcast %30 : vector<1x512xf32> to vector<16x512xf32>
    %32 = arith.addf %29, %31 : vector<16x512xf32>
    %cst_18 = arith.constant 0.000000e+00 : f32
    %33 = vector.broadcast %cst_18 : f32 to vector<16x512xf32>
    %34 = arith.cmpf oge, %32, %33 : vector<16x512xf32>
    %35 = vector.broadcast %2 : f32 to vector<16x512xf32>
    %36 = arith.mulf %35, %32 : vector<16x512xf32>
    %37 = arith.select %34, %32, %36 : vector<16x512xi1>, vector<16x512xf32>
    %38 = arith.truncf %37 : vector<16x512xf32> to vector<16x512xbf16>
    %c0_19 = arith.constant 0 : index
    %c0_20 = arith.constant 0 : index
    %39 = vector.load %arg9[%c0_19, %c0_20] : memref<512x256xbf16, #tpu.memory_space<vmem>>, vector<512x256xbf16>
    %cst_21 = arith.constant dense<0.000000e+00> : vector<16x256xf32>
    %40 = tpu.matmul %38, %39, %cst_21 {dimension_numbers = #tpu.dot_dimension_numbers<[1], [0], [0], [1], [0, 0, 1, 1], [], []>} : vector<16x512xbf16>, vector<512x256xbf16>, vector<16x256xf32> -> vector<16x256xf32>
    %c0_22 = arith.constant 0 : index
    %c0_23 = arith.constant 0 : index
    %41 = vector.load %arg10[%c0_22, %c0_23] : memref<1x256xf32, #tpu.memory_space<vmem>>, vector<1x256xf32>
    %42 = vector.broadcast %41 : vector<1x256xf32> to vector<16x256xf32>
    %43 = arith.addf %40, %42 : vector<16x256xf32>
    %cst_24 = arith.constant 0.000000e+00 : f32
    %44 = vector.broadcast %cst_24 : f32 to vector<16x256xf32>
    %45 = arith.cmpf oge, %43, %44 : vector<16x256xf32>
    %46 = vector.broadcast %3 : f32 to vector<16x256xf32>
    %47 = arith.mulf %46, %43 : vector<16x256xf32>
    %48 = arith.select %45, %43, %47 : vector<16x256xi1>, vector<16x256xf32>
    %c0_25 = arith.constant 0 : index
    %c0_26 = arith.constant 0 : index
    %49 = vector.load %arg12[%c0_25, %c0_26] : memref<16x128xf32, #tpu.memory_space<vmem>>, vector<16x128xf32>
    tpu.vector_store %arg12[%c0_25, %c0_26], %26 {strides = array<i32>} : memref<16x128xf32, #tpu.memory_space<vmem>>, vector<16x128xf32>,
    %c0_27 = arith.constant 0 : index
    %c0_28 = arith.constant 0 : index
    %50 = vector.load %arg11[%c0_27, %c0_28] : memref<16x256xf32, #tpu.memory_space<vmem>>, vector<16x256xf32>
    tpu.vector_store %arg11[%c0_27, %c0_28], %48 {strides = array<i32>} : memref<16x256xf32, #tpu.memory_space<vmem>>, vector<16x256xf32>,
    return
  }
  func.func @transform_0(%arg0: i32) -> i32 {
    %c0_i32 = arith.constant 0 : i32
    %c0_i32_0 = arith.constant 0 : i32
    return %c0_i32 : i32
  }
  func.func @transform_1(%arg0: i32) -> (i32, i32) {
    %c0_i32 = arith.constant 0 : i32
    %c0_i32_0 = arith.constant 0 : i32
    return %arg0, %c0_i32 : i32, i32
  }
  func.func @transform_2(%arg0: i32) -> (i32, i32) {
    %c0_i32 = arith.constant 0 : i32
    %c0_i32_0 = arith.constant 0 : i32
    %c0_i32_1 = arith.constant 0 : i32
    return %c0_i32, %c0_i32_0 : i32, i32
  }
  func.func @transform_3(%arg0: i32) -> (i32, i32) {
    %c0_i32 = arith.constant 0 : i32
    %c0_i32_0 = arith.constant 0 : i32
    %c0_i32_1 = arith.constant 0 : i32
    return %c0_i32, %c0_i32_0 : i32, i32
  }
  func.func @transform_4(%arg0: i32) -> (i32, i32) {
    %c0_i32 = arith.constant 0 : i32
    %c0_i32_0 = arith.constant 0 : i32
    %c0_i32_1 = arith.constant 0 : i32
    return %c0_i32, %c0_i32_0 : i32, i32
  }
  func.func @transform_5(%arg0: i32) -> (i32, i32) {
    %c0_i32 = arith.constant 0 : i32
    %c0_i32_0 = arith.constant 0 : i32
    %c0_i32_1 = arith.constant 0 : i32
    return %c0_i32, %c0_i32_0 : i32, i32
  }
  func.func @transform_6(%arg0: i32) -> (i32, i32) {
    %c0_i32 = arith.constant 0 : i32
    %c0_i32_0 = arith.constant 0 : i32
    %c0_i32_1 = arith.constant 0 : i32
    return %c0_i32, %c0_i32_0 : i32, i32
  }
  func.func @transform_7(%arg0: i32) -> (i32, i32) {
    %c0_i32 = arith.constant 0 : i32
    %c0_i32_0 = arith.constant 0 : i32
    %c0_i32_1 = arith.constant 0 : i32
    return %c0_i32, %c0_i32_0 : i32, i32
  }
  func.func @transform_8(%arg0: i32) -> (i32, i32) {
    %c0_i32 = arith.constant 0 : i32
    %c0_i32_0 = arith.constant 0 : i32
    %c0_i32_1 = arith.constant 0 : i32
    return %c0_i32, %c0_i32_0 : i32, i32
  }
  func.func @transform_9(%arg0: i32) -> (i32, i32) {
    %c0_i32 = arith.constant 0 : i32
    %c0_i32_0 = arith.constant 0 : i32
    %c0_i32_1 = arith.constant 0 : i32
    return %c0_i32, %c0_i32_0 : i32, i32
  }
  func.func @transform_10(%arg0: i32) -> (i32, i32) {
    %c0_i32 = arith.constant 0 : i32
    %c0_i32_0 = arith.constant 0 : i32
    return %arg0, %c0_i32 : i32, i32
  }
  func.func @transform_11(%arg0: i32) -> (i32, i32) {
    %c0_i32 = arith.constant 0 : i32
    %c0_i32_0 = arith.constant 0 : i32
    return %arg0, %c0_i32 : i32, i32
  }
}

</mosaic_0001>

<llo_original>
// kernel: ae_forward.1
$region0: #{ae_forward.1}
  #allocation0 [shape = 'u32[]', space=smem, size = 0x4, offset = 0x4, fixed_abs, tag = 'smem constant byte address 0x4 - core index']
  #allocation1 [shape = 'u32[144,128]{1,0:T(1,128)}', space=vmem, size = 0x12000, scoped, tag = 'internal scratch']
  %s0 = inlined_call_operand.hbm [shape: f32[4], index: 0, kind: input, shape index: {}]
  %s1 = inlined_call_operand.hbm [shape: f32[16,256], index: 1, kind: input, shape index: {}]
  %s2 = inlined_call_operand.hbm [shape: bf16[256,512], index: 2, kind: input, shape index: {}]
  %s3 = inlined_call_operand.vmem [shape: f32[1,512], index: 3, kind: input, shape index: {}]
  %s4 = inlined_call_operand.hbm [shape: bf16[512,128], index: 4, kind: input, shape index: {}]
  %s5 = inlined_call_operand.hbm [shape: f32[1,128], index: 5, kind: input, shape index: {}]
  %s6 = inlined_call_operand.hbm [shape: bf16[128,512], index: 6, kind: input, shape index: {}]
  %s7 = inlined_call_operand.vmem [shape: f32[1,512], index: 7, kind: input, shape index: {}]
  %s8 = inlined_call_operand.hbm [shape: bf16[512,256], index: 8, kind: input, shape index: {}]
  %s9 = inlined_call_operand.vmem [shape: f32[1,256], index: 9, kind: input, shape index: {}]
  %s10 = inlined_call_operand.hbm [shape: f32[16,256], index: 10, kind: output, shape index: {0}]
  %s11 = inlined_call_operand.hbm [shape: f32[16,128], index: 11, kind: output, shape index: {1}]
  %12 = xla_tuple %s10, %s11
  %s13 = sld [smem:[#allocation0]]
  $region86: #{ae_forward.1} parent=0
    _
  %s15 = ssub.s32 1, %s13
  %s16 = scalar_select 0, %s15, %s13
  $region1: #{ae_forward.1} parent=0
    #allocation2 [shape = 'u8[512]{0}', space=smem, size = 0x200, scoped, tag = 'input window, operand 0, single buffered']
    #allocation3 [shape = 's32[1]{0}', space=sflag, size = 0x4, scoped, tag = 'scoped memory for ae_forward.1']
    #allocation4 [shape = 's32[1]{0}', space=sflag, size = 0x4, scoped, tag = 'scoped memory for ae_forward.1']
    #allocation5 [shape = 's32[1]{0}', space=sflag, size = 0x4, scoped, tag = 'scoped memory for ae_forward.1']
    #allocation6 [shape = 'u8[16384]{0}', space=vmem, size = 0x4000, scoped, tag = 'input window, operand 1, single buffered']
    #allocation7 [shape = 'u8[262144]{0}', space=vmem, size = 0x40000, scoped, tag = 'input window, operand 2, single buffered']
    #allocation8 [shape = 's32[1]{0}', space=sflag, size = 0x4, scoped, tag = 'scoped memory for ae_forward.1']
    #allocation9 [shape = 'u8[131072]{0}', space=vmem, size = 0x20000, scoped, tag = 'input window, operand 4, single buffered']
    #allocation10 [shape = 'u8[512]{0}', space=vmem, size = 0x400, scoped, tag = 'input window, operand 5, single buffered']
    #allocation11 [shape = 's32[1]{0}', space=sflag, size = 0x4, scoped, tag = 'scoped memory for ae_forward.1']
    #allocation12 [shape = 'u8[131072]{0}', space=vmem, size = 0x20000, scoped, tag = 'input window, operand 6, single buffered']
    #allocation13 [shape = 'u8[262144]{0}', space=vmem, size = 0x40000, scoped, tag = 'input window, operand 8, single buffered']
    #allocation14 [shape = 's32[1]{0}', space=sflag, size = 0x4, scoped, tag = 'scoped memory for ae_forward.1']
    #allocation15 [shape = 'u8[16384]{0}', space=vmem, size = 0x4000, scoped, tag = 'output window, operand 0, single buffered']
    #allocation16 [shape = 'u8[8192]{0}', space=vmem, size = 0x2000, scoped, tag = 'output window, operand 1, single buffered']
    #allocation17 [shape = 's32[1]{0}', space=sflag, size = 0x4, scoped, tag = 'scoped memory for ae_forward.1']
    %17 = vsyncpa [#allocation5], 0
    %18 = vsyncpa [#allocation3], 0
    %19 = vsyncpa [#allocation8], 0
    %20 = vsyncpa [#allocation11], 0
    %21 = vsyncpa [#allocation14], 0
    %22 = vsyncpa [#allocation4], 0
    %23 = vsyncpa [#allocation17], 0
    // Predicated region
    $region2: #{ae_forward.1} parent=1 // pred_check
      _
    $region3: #{ae_forward.1} parent=1 // pred_check_branch
      %25 = sbr.rel (0) target = $region5
    $region4: #{ae_forward.1} parent=1 // pred_region
      %s27 = ssub.s32 16, 16
      %28 = vsyncadd [#allocation5], %s27
      %31 = dma.hbm_to_smem %s0, 16, [#allocation2], [#allocation5]
    $region5: #{ae_forward.1} parent=1 // pred_fallthru
      _
    // Predicated region
    $region6: #{ae_forward.1} parent=1 // pred_check
      _
    $region7: #{ae_forward.1} parent=1 // pred_check_branch
      %33 = sbr.rel (0) target = $region9
    $region8: #{ae_forward.1} parent=1 // pred_region
      %s35 = ssub.s32 512, 512
      %36 = vsyncadd [#allocation3], %s35
      %s37 = sshll.u32 [#allocation6], 4
      %s38 = int_to_ptr.vmem [resolvable:$true] %s37
      %43 = dma.hbm_to_vmem [thread:$0]  %s1, 512, %s38, [#allocation3], 256, 256, 16
    $region9: #{ae_forward.1} parent=1 // pred_fallthru
      _
    // Predicated region
    $region10: #{ae_forward.1} parent=1 // pred_check
      _
    $region11: #{ae_forward.1} parent=1 // pred_check_branch
      %45 = sbr.rel (0) target = $region13
    $region12: #{ae_forward.1} parent=1 // pred_region
      %s47 = ssub.s32 8192, 8192
      %48 = vsyncadd [#allocation8], %s47
      %s49 = sshll.u32 [#allocation7], 4
      %s50 = int_to_ptr.vmem [resolvable:$true] %s49
      %55 = dma.hbm_to_vmem [thread:$0]  %s2, 8192, %s50, [#allocation8], 256, 256, 16
    $region13: #{ae_forward.1} parent=1 // pred_fallthru
      _
    // Predicated region
    $region14: #{ae_forward.1} parent=1 // pred_check
      _
    $region15: #{ae_forward.1} parent=1 // pred_check_branch
      %57 = sbr.rel (0) target = $region17
    $region16: #{ae_forward.1} parent=1 // pred_region
      _
    $region17: #{ae_forward.1} parent=1 // pred_fallthru
      _
    // Predicated region
    $region18: #{ae_forward.1} parent=1 // pred_check
      _
    $region19: #{ae_forward.1} parent=1 // pred_check_branch
      %59 = sbr.rel (0) target = $region21
    $region20: #{ae_forward.1} parent=1 // pred_region
      %s61 = ssub.s32 4096, 4096
      %62 = vsyncadd [#allocation8], %s61
      %s63 = sshll.u32 [#allocation9], 4
      %s64 = int_to_ptr.vmem [resolvable:$true] %s63
      %69 = dma.hbm_to_vmem [thread:$0]  %s4, 4096, %s64, [#allocation8], 64, 64, 4
    $region21: #{ae_forward.1} parent=1 // pred_fallthru
      _
    // Predicated region
    $region22: #{ae_forward.1} parent=1 // pred_check
      _
    $region23: #{ae_forward.1} parent=1 // pred_check_branch
      %71 = sbr.rel (0) target = $region25
    $region24: #{ae_forward.1} parent=1 // pred_region
      %s73 = ssub.s32 16, 16
      %74 = vsyncadd [#allocation11], %s73
      %s76 = sshll.u32 [#allocation10], 4
      %s77 = int_to_ptr.vmem [resolvable:$true] %s76
      %79 = dma.hbm_to_vmem [thread:$0]  %s5, 16, %s77, [#allocation11]
    $region25: #{ae_forward.1} parent=1 // pred_fallthru
      _
    // Predicated region
    $region26: #{ae_forward.1} parent=1 // pred_check
      _
    $region27: #{ae_forward.1} parent=1 // pred_check_branch
      %81 = sbr.rel (0) target = $region29
    $region28: #{ae_forward.1} parent=1 // pred_region
      %s83 = ssub.s32 4096, 4096
      %84 = vsyncadd [#allocation11], %s83
      %s85 = sshll.u32 [#allocation12], 4
      %s86 = int_to_ptr.vmem [resolvable:$true] %s85
      %91 = dma.hbm_to_vmem [thread:$0]  %s6, 4096, %s86, [#allocation11], 256, 256, 16
    $region29: #{ae_forward.1} parent=1 // pred_fallthru
      _
    // Predicated region
    $region30: #{ae_forward.1} parent=1 // pred_check
      _
    $region31: #{ae_forward.1} parent=1 // pred_check_branch
      %93 = sbr.rel (0) target = $region33
    $region32: #{ae_forward.1} parent=1 // pred_region
      _
    $region33: #{ae_forward.1} parent=1 // pred_fallthru
      _
    // Predicated region
    $region34: #{ae_forward.1} parent=1 // pred_check
      _
    $region35: #{ae_forward.1} parent=1 // pred_check_branch
      %95 = sbr.rel (0) target = $region37
    $region36: #{ae_forward.1} parent=1 // pred_region
      %s97 = ssub.s32 8192, 8192
      %98 = vsyncadd [#allocation14], %s97
      %s99 = sshll.u32 [#allocation13], 4
      %s100 = int_to_ptr.vmem [resolvable:$true] %s99
      %105 = dma.hbm_to_vmem [thread:$0]  %s8, 8192, %s100, [#allocation14], 128, 128, 8
    $region37: #{ae_forward.1} parent=1 // pred_fallthru
      _
    // Predicated region
    $region38: #{ae_forward.1} parent=1 // pred_check
      _
    $region39: #{ae_forward.1} parent=1 // pred_check_branch
      %107 = sbr.rel (0) target = $region41
    $region40: #{ae_forward.1} parent=1 // pred_region
      _
    $region41: #{ae_forward.1} parent=1 // pred_fallthru
      _
    // Predicated region
    $region42: #{ae_forward.1} parent=1 // pred_check
      _
    $region43: #{ae_forward.1} parent=1 // pred_check_branch
      %109 = sbr.rel (0) target = $region45
    $region44: #{ae_forward.1} parent=1 // pred_region
      %110 = dma.done [#allocation5], 16
    $region45: #{ae_forward.1} parent=1 // pred_fallthru
      _
    // Predicated region
    $region46: #{ae_forward.1} parent=1 // pred_check
      _
    $region47: #{ae_forward.1} parent=1 // pred_check_branch
      %112 = sbr.rel (0) target = $region49
    $region48: #{ae_forward.1} parent=1 // pred_region
      %113 = dma.done [#allocation3], 512
    $region49: #{ae_forward.1} parent=1 // pred_fallthru
      _
    // Predicated region
    $region50: #{ae_forward.1} parent=1 // pred_check
      _
    $region51: #{ae_forward.1} parent=1 // pred_check_branch
      %115 = sbr.rel (0) target = $region53
    $region52: #{ae_forward.1} parent=1 // pred_region
      %116 = dma.done [#allocation8], 8192
    $region53: #{ae_forward.1} parent=1 // pred_fallthru
      _
    // Predicated region
    $region54: #{ae_forward.1} parent=1 // pred_check
      _
    $region55: #{ae_forward.1} parent=1 // pred_check_branch
      %118 = sbr.rel (0) target = $region57
    $region56: #{ae_forward.1} parent=1 // pred_region
      %119 = dma.done [#allocation8], 4096
    $region57: #{ae_forward.1} parent=1 // pred_fallthru
      _
    // Predicated region
    $region58: #{ae_forward.1} parent=1 // pred_check
      _
    $region59: #{ae_forward.1} parent=1 // pred_check_branch
      %121 = sbr.rel (0) target = $region61
    $region60: #{ae_forward.1} parent=1 // pred_region
      %122 = dma.done [#allocation11], 16
    $region61: #{ae_forward.1} parent=1 // pred_fallthru
      _
    // Predicated region
    $region62: #{ae_forward.1} parent=1 // pred_check
      _
    $region63: #{ae_forward.1} parent=1 // pred_check_branch
      %124 = sbr.rel (0) target = $region65
    $region64: #{ae_forward.1} parent=1 // pred_region
      %125 = dma.done [#allocation11], 4096
    $region65: #{ae_forward.1} parent=1 // pred_fallthru
      _
    // Predicated region
    $region66: #{ae_forward.1} parent=1 // pred_check
      _
    $region67: #{ae_forward.1} parent=1 // pred_check_branch
      %127 = sbr.rel (0) target = $region69
    $region68: #{ae_forward.1} parent=1 // pred_region
      %128 = dma.done [#allocation14], 8192
    $region69: #{ae_forward.1} parent=1 // pred_fallthru
      _
    %129 = sfence
    %s131 = sld [smem:[#allocation2]]
    %s132 = sld [smem:[#allocation2 + $0x1]]
    %s133 = sld [smem:[#allocation2 + $0x2]]
    %s134 = sld [smem:[#allocation2 + $0x3]]
    %v135 = vld [vmem:[#allocation6] sm:$0xff]
    %v136 = vld [vmem:[#allocation6 + $0x8] sm:$0xff]
    %v137 = vld [vmem:[#allocation6 + $0x10] sm:$0xff]
    %v138 = vld [vmem:[#allocation6 + $0x18] sm:$0xff]
    %v139 = vpack.c.bf16 %v137, %v135
    %v140 = vpack.c.bf16 %v138, %v136
    %v141 = vld [vmem:[#allocation7] sm:$0xff]
    %v142 = vld [vmem:[#allocation7 + $0x8] sm:$0xff]
    %v143 = vld [vmem:[#allocation7 + $0x10] sm:$0xff]
    %v144 = vld [vmem:[#allocation7 + $0x18] sm:$0xff]
    %v145 = vld [vmem:[#allocation7 + $0x20] sm:$0xff]
    %v146 = vld [vmem:[#allocation7 + $0x28] sm:$0xff]
    %v147 = vld [vmem:[#allocation7 + $0x30] sm:$0xff]
    %v148 = vld [vmem:[#allocation7 + $0x38] sm:$0xff]
    %v149 = vld [vmem:[#allocation7 + $0x40] sm:$0xff]
    %v150 = vld [vmem:[#allocation7 + $0x48] sm:$0xff]
    %v151 = vld [vmem:[#allocation7 + $0x50] sm:$0xff]
    %v152 = vld [vmem:[#allocation7 + $0x58] sm:$0xff]
    %v153 = vld [vmem:[#allocation7 + $0x60] sm:$0xff]
    %v154 = vld [vmem:[#allocation7 + $0x68] sm:$0xff]
    %v155 = vld [vmem:[#allocation7 + $0x70] sm:$0xff]
    %v156 = vld [vmem:[#allocation7 + $0x78] sm:$0xff]
    %v157 = vld [vmem:[#allocation7 + $0x80] sm:$0xff]
    %v158 = vld [vmem:[#allocation7 + $0x88] sm:$0xff]
    %v159 = vld [vmem:[#allocation7 + $0x90] sm:$0xff]
    %v160 = vld [vmem:[#allocation7 + $0x98] sm:$0xff]
    %v161 = vld [vmem:[#allocation7 + $0xa0] sm:$0xff]
    %v162 = vld [vmem:[#allocation7 + $0xa8] sm:$0xff]
    %v163 = vld [vmem:[#allocation7 + $0xb0] sm:$0xff]
    %v164 = vld [vmem:[#allocation7 + $0xb8] sm:$0xff]
    %v165 = vld [vmem:[#allocation7 + $0xc0] sm:$0xff]
    %v166 = vld [vmem:[#allocation7 + $0xc8] sm:$0xff]
    %v167 = vld [vmem:[#allocation7 + $0xd0] sm:$0xff]
    %v168 = vld [vmem:[#allocation7 + $0xd8] sm:$0xff]
    %v169 = vld [vmem:[#allocation7 + $0xe0] sm:$0xff]
    %v170 = vld [vmem:[#allocation7 + $0xe8] sm:$0xff]
    %v171 = vld [vmem:[#allocation7 + $0xf0] sm:$0xff]
    %v172 = vld [vmem:[#allocation7 + $0xf8] sm:$0xff]
    %v173 = vld [vmem:[#allocation7 + $0x100] sm:$0xff]
    %v174 = vld [vmem:[#allocation7 + $0x108] sm:$0xff]
    %v175 = vld [vmem:[#allocation7 + $0x110] sm:$0xff]
    %v176 = vld [vmem:[#allocation7 + $0x118] sm:$0xff]
    %v177 = vld [vmem:[#allocation7 + $0x120] sm:$0xff]
    %v178 = vld [vmem:[#allocation7 + $0x128] sm:$0xff]
    %v179 = vld [vmem:[#allocation7 + $0x130] sm:$0xff]
    %v180 = vld [vmem:[#allocation7 + $0x138] sm:$0xff]
    %v181 = vld [vmem:[#allocation7 + $0x140] sm:$0xff]
    %v182 = vld [vmem:[#allocation7 + $0x148] sm:$0xff]
    %v183 = vld [vmem:[#allocation7 + $0x150] sm:$0xff]
    %v184 = vld [vmem:[#allocation7 + $0x158] sm:$0xff]
    %v185 = vld [vmem:[#allocation7 + $0x160] sm:$0xff]
    %v186 = vld [vmem:[#allocation7 + $0x168] sm:$0xff]
    %v187 = vld [vmem:[#allocation7 + $0x170] sm:$0xff]
    %v188 = vld [vmem:[#allocation7 + $0x178] sm:$0xff]
    %v189 = vld [vmem:[#allocation7 + $0x180] sm:$0xff]
    %v190 = vld [vmem:[#allocation7 + $0x188] sm:$0xff]
    %v191 = vld [vmem:[#allocation7 + $0x190] sm:$0xff]
    %v192 = vld [vmem:[#allocation7 + $0x198] sm:$0xff]
    %v193 = vld [vmem:[#allocation7 + $0x1a0] sm:$0xff]
    %v194 = vld [vmem:[#allocation7 + $0x1a8] sm:$0xff]
    %v195 = vld [vmem:[#allocation7 + $0x1b0] sm:$0xff]
    %v196 = vld [vmem:[#allocation7 + $0x1b8] sm:$0xff]
    %v197 = vld [vmem:[#allocation7 + $0x1c0] sm:$0xff]
    %v198 = vld [vmem:[#allocation7 + $0x1c8] sm:$0xff]
    %v199 = vld [vmem:[#allocation7 + $0x1d0] sm:$0xff]
    %v200 = vld [vmem:[#allocation7 + $0x1d8] sm:$0xff]
    %v201 = vld [vmem:[#allocation7 + $0x1e0] sm:$0xff]
    %v202 = vld [vmem:[#allocation7 + $0x1e8] sm:$0xff]
    %v203 = vld [vmem:[#allocation7 + $0x1f0] sm:$0xff]
    %v204 = vld [vmem:[#allocation7 + $0x1f8] sm:$0xff]
    %v205 = vld [vmem:[%s3] sm:$0xf]
    %v207 = vlaneseq
    %v208 = vshrl.u32 %v207, 7
    %v209 = vsub.s32 0, %v208
    %v210 = vrot.slane %v205, %v209
    %v211 = vlaneseq
    %v212 = vshrl.u32 %v211, 7
    %v213 = vsub.s32 1, %v212
    %v214 = vrot.slane %v205, %v213
    %v215 = vlaneseq
    %v216 = vshrl.u32 %v215, 7
    %v217 = vsub.s32 2, %v216
    %v218 = vrot.slane %v205, %v217
    %v219 = vlaneseq
    %v220 = vshrl.u32 %v219, 7
    %v221 = vsub.s32 3, %v220
    %v222 = vrot.slane %v205, %v221
    %v291 = vunpack.c.l.b16 %v141
    %v292 = vunpack.c.h.b16 %v141
    %v293 = vunpack.c.l.b16 %v142
    %v294 = vunpack.c.h.b16 %v142
    %v295 = vunpack.c.l.b16 %v143
    %v296 = vunpack.c.h.b16 %v143
    %v297 = vunpack.c.l.b16 %v144
    %v298 = vunpack.c.h.b16 %v144
    %v299 = vunpack.c.l.b16 %v145
    %v300 = vunpack.c.h.b16 %v145
    %v301 = vunpack.c.l.b16 %v146
    %v302 = vunpack.c.h.b16 %v146
    %v303 = vunpack.c.l.b16 %v147
    %v304 = vunpack.c.h.b16 %v147
    %v305 = vunpack.c.l.b16 %v148
    %v306 = vunpack.c.h.b16 %v148
    %v307 = vunpack.c.l.b16 %v149
    %v308 = vunpack.c.h.b16 %v149
    %v309 = vunpack.c.l.b16 %v150
    %v310 = vunpack.c.h.b16 %v150
    %v311 = vunpack.c.l.b16 %v151
    %v312 = vunpack.c.h.b16 %v151
    %v313 = vunpack.c.l.b16 %v152
    %v314 = vunpack.c.h.b16 %v152
    %v315 = vunpack.c.l.b16 %v153
    %v316 = vunpack.c.h.b16 %v153
    %v317 = vunpack.c.l.b16 %v154
    %v318 = vunpack.c.h.b16 %v154
    %v319 = vunpack.c.l.b16 %v155
    %v320 = vunpack.c.h.b16 %v155
    %v321 = vunpack.c.l.b16 %v156
    %v322 = vunpack.c.h.b16 %v156
    %v323 = vunpack.c.l.b16 %v157
    %v324 = vunpack.c.h.b16 %v157
    %v325 = vunpack.c.l.b16 %v158
    %v326 = vunpack.c.h.b16 %v158
    %v327 = vunpack.c.l.b16 %v159
    %v328 = vunpack.c.h.b16 %v159
    %v329 = vunpack.c.l.b16 %v160
    %v330 = vunpack.c.h.b16 %v160
    %v331 = vunpack.c.l.b16 %v161
    %v332 = vunpack.c.h.b16 %v161
    %v333 = vunpack.c.l.b16 %v162
    %v334 = vunpack.c.h.b16 %v162
    %v335 = vunpack.c.l.b16 %v163
    %v336 = vunpack.c.h.b16 %v163
    %v337 = vunpack.c.l.b16 %v164
    %v338 = vunpack.c.h.b16 %v164
    %v339 = vunpack.c.l.b16 %v165
    %v340 = vunpack.c.h.b16 %v165
    %v341 = vunpack.c.l.b16 %v166
    %v342 = vunpack.c.h.b16 %v166
    %v343 = vunpack.c.l.b16 %v167
    %v344 = vunpack.c.h.b16 %v167
    %v345 = vunpack.c.l.b16 %v168
    %v346 = vunpack.c.h.b16 %v168
    %v347 = vunpack.c.l.b16 %v169
    %v348 = vunpack.c.h.b16 %v169
    %v349 = vunpack.c.l.b16 %v170
    %v350 = vunpack.c.h.b16 %v170
    %v351 = vunpack.c.l.b16 %v171
    %v352 = vunpack.c.h.b16 %v171
    %v353 = vunpack.c.l.b16 %v172
    %v354 = vunpack.c.h.b16 %v172
    %v355 = vunpack.c.l.b16 %v173
    %v356 = vunpack.c.h.b16 %v173
    %v357 = vunpack.c.l.b16 %v174
    %v358 = vunpack.c.h.b16 %v174
    %v359 = vunpack.c.l.b16 %v175
    %v360 = vunpack.c.h.b16 %v175
    %v361 = vunpack.c.l.b16 %v176
    %v362 = vunpack.c.h.b16 %v176
    %v363 = vunpack.c.l.b16 %v177
    %v364 = vunpack.c.h.b16 %v177
    %v365 = vunpack.c.l.b16 %v178
    %v366 = vunpack.c.h.b16 %v178
    %v367 = vunpack.c.l.b16 %v179
    %v368 = vunpack.c.h.b16 %v179
    %v369 = vunpack.c.l.b16 %v180
    %v370 = vunpack.c.h.b16 %v180
    %v371 = vunpack.c.l.b16 %v181
    %v372 = vunpack.c.h.b16 %v181
    %v373 = vunpack.c.l.b16 %v182
    %v374 = vunpack.c.h.b16 %v182
    %v375 = vunpack.c.l.b16 %v183
    %v376 = vunpack.c.h.b16 %v183
    %v377 = vunpack.c.l.b16 %v184
    %v378 = vunpack.c.h.b16 %v184
    %v379 = vunpack.c.l.b16 %v185
    %v380 = vunpack.c.h.b16 %v185
    %v381 = vunpack.c.l.b16 %v186
    %v382 = vunpack.c.h.b16 %v186
    %v383 = vunpack.c.l.b16 %v187
    %v384 = vunpack.c.h.b16 %v187
    %v385 = vunpack.c.l.b16 %v188
    %v386 = vunpack.c.h.b16 %v188
    %v387 = vunpack.c.l.b16 %v189
    %v388 = vunpack.c.h.b16 %v189
    %v389 = vunpack.c.l.b16 %v190
    %v390 = vunpack.c.h.b16 %v190
    %v391 = vunpack.c.l.b16 %v191
    %v392 = vunpack.c.h.b16 %v191
    %v393 = vunpack.c.l.b16 %v192
    %v394 = vunpack.c.h.b16 %v192
    %v395 = vunpack.c.l.b16 %v193
    %v396 = vunpack.c.h.b16 %v193
    %v397 = vunpack.c.l.b16 %v194
    %v398 = vunpack.c.h.b16 %v194
    %v399 = vunpack.c.l.b16 %v195
    %v400 = vunpack.c.h.b16 %v195
    %v401 = vunpack.c.l.b16 %v196
    %v402 = vunpack.c.h.b16 %v196
    %v403 = vunpack.c.l.b16 %v197
    %v404 = vunpack.c.h.b16 %v197
    %v405 = vunpack.c.l.b16 %v198
    %v406 = vunpack.c.h.b16 %v198
    %v407 = vunpack.c.l.b16 %v199
    %v408 = vunpack.c.h.b16 %v199
    %v409 = vunpack.c.l.b16 %v200
    %v410 = vunpack.c.h.b16 %v200
    %v411 = vunpack.c.l.b16 %v201
    %v412 = vunpack.c.h.b16 %v201
    %v413 = vunpack.c.l.b16 %v202
    %v414 = vunpack.c.h.b16 %v202
    %v415 = vunpack.c.l.b16 %v203
    %v416 = vunpack.c.h.b16 %v203
    %v417 = vunpack.c.l.b16 %v204
    %v418 = vunpack.c.h.b16 %v204
    %v419 = vpack.c.b16 %v295, %v291
    %v420 = vpack.c.b16 %v296, %v292
    %v421 = vpack.c.b16 %v297, %v293
    %v422 = vpack.c.b16 %v298, %v294
    %v423 = vpack.c.b16 %v303, %v299
    %v424 = vpack.c.b16 %v304, %v300
    %v425 = vpack.c.b16 %v305, %v301
    %v426 = vpack.c.b16 %v306, %v302
    %v427 = vpack.c.b16 %v311, %v307
    %v428 = vpack.c.b16 %v312, %v308
    %v429 = vpack.c.b16 %v313, %v309
    %v430 = vpack.c.b16 %v314, %v310
    %v431 = vpack.c.b16 %v319, %v315
    %v432 = vpack.c.b16 %v320, %v316
    %v433 = vpack.c.b16 %v321, %v317
    %v434 = vpack.c.b16 %v322, %v318
    %v435 = vpack.c.b16 %v327, %v323
    %v436 = vpack.c.b16 %v328, %v324
    %v437 = vpack.c.b16 %v329, %v325
    %v438 = vpack.c.b16 %v330, %v326
    %v439 = vpack.c.b16 %v335, %v331
    %v440 = vpack.c.b16 %v336, %v332
    %v441 = vpack.c.b16 %v337, %v333
    %v442 = vpack.c.b16 %v338, %v334
    %v443 = vpack.c.b16 %v343, %v339
    %v444 = vpack.c.b16 %v344, %v340
    %v445 = vpack.c.b16 %v345, %v341
    %v446 = vpack.c.b16 %v346, %v342
    %v447 = vpack.c.b16 %v351, %v347
    %v448 = vpack.c.b16 %v352, %v348
    %v449 = vpack.c.b16 %v353, %v349
    %v450 = vpack.c.b16 %v354, %v350
    %v451 = vpack.c.b16 %v359, %v355
    %v452 = vpack.c.b16 %v360, %v356
    %v453 = vpack.c.b16 %v361, %v357
    %v454 = vpack.c.b16 %v362, %v358
    %v455 = vpack.c.b16 %v367, %v363
    %v456 = vpack.c.b16 %v368, %v364
    %v457 = vpack.c.b16 %v369, %v365
    %v458 = vpack.c.b16 %v370, %v366
    %v459 = vpack.c.b16 %v375, %v371
    %v460 = vpack.c.b16 %v376, %v372
    %v461 = vpack.c.b16 %v377, %v373
    %v462 = vpack.c.b16 %v378, %v374
    %v463 = vpack.c.b16 %v383, %v379
    %v464 = vpack.c.b16 %v384, %v380
    %v465 = vpack.c.b16 %v385, %v381
    %v466 = vpack.c.b16 %v386, %v382
    %v467 = vpack.c.b16 %v391, %v387
    %v468 = vpack.c.b16 %v392, %v388
    %v469 = vpack.c.b16 %v393, %v389
    %v470 = vpack.c.b16 %v394, %v390
    %v471 = vpack.c.b16 %v399, %v395
    %v472 = vpack.c.b16 %v400, %v396
    %v473 = vpack.c.b16 %v401, %v397
    %v474 = vpack.c.b16 %v402, %v398
    %v475 = vpack.c.b16 %v407, %v403
    %v476 = vpack.c.b16 %v408, %v404
    %v477 = vpack.c.b16 %v409, %v405
    %v478 = vpack.c.b16 %v410, %v406
    %v479 = vpack.c.b16 %v415, %v411
    %v480 = vpack.c.b16 %v416, %v412
    %v481 = vpack.c.b16 %v417, %v413
    %v482 = vpack.c.b16 %v418, %v414
    %547 = vmatprep.subr.bf16.mxu0 %v448
    %548 = vmatpush1.bf16.msra.mxu0 %v447
    %549 = vmatprep.subr.bf16.mxu0 %v444
    %550 = vmatpush1.bf16.msra.mxu0 %v443
    %551 = vmatprep.subr.bf16.mxu0 %v440
    %552 = vmatpush1.bf16.msra.mxu0 %v439
    %553 = vmatprep.subr.bf16.mxu0 %v436
    %554 = vmatpush1.bf16.msra.mxu0 %v435
    %555 = vmatprep.subr.bf16.mxu0 %v432
    %556 = vmatpush1.bf16.msra.mxu0 %v431
    %557 = vmatprep.subr.bf16.mxu0 %v428
    %558 = vmatpush1.bf16.msra.mxu0 %v427
    %559 = vmatprep.subr.bf16.mxu0 %v424
    %560 = vmatpush1.bf16.msra.mxu0 %v423
    %561 = vmatprep.subr.bf16.mxu0 %v420
    %562 = vmatpush1.bf16.msra.mxu0 %v419
    %563 = vmatprep.subr.bf16.mxu0 %v480
    %564 = vmatpush2.bf16.msra.mxu0 %v479
    %565 = vmatprep.subr.bf16.mxu0 %v476
    %566 = vmatpush2.bf16.msra.mxu0 %v475
    %567 = vmatprep.subr.bf16.mxu0 %v472
    %568 = vmatpush2.bf16.msra.mxu0 %v471
    %569 = vmatprep.subr.bf16.mxu0 %v468
    %570 = vmatpush2.bf16.msra.mxu0 %v467
    %571 = vmatprep.subr.bf16.mxu0 %v464
    %572 = vmatpush2.bf16.msra.mxu0 %v463
    %573 = vmatprep.subr.bf16.mxu0 %v460
    %574 = vmatpush2.bf16.msra.mxu0 %v459
    %575 = vmatprep.subr.bf16.mxu0 %v456
    %576 = vmatpush2.bf16.msra.mxu0 %v455
    %577 = vmatprep.subr.bf16.mxu0 %v452
    %578 = vmatpush2.bf16.msra.mxu0 %v451
    %579 = vmatprep.mubr.bf16.mxu0 %v140
    %580 = vmatmul.mubr.bf16.gmra.mxu0 %v139
    %v581 = vpop.f32.mrf.mxu0
    %v582 = vadd.f32 %v210, %v581
    %v583 = vpop.f32.mrf.mxu0
    %v584 = vadd.f32 %v214, %v583
    %v585 = vpop.f32.mrf.mxu0
    %v586 = vadd.f32 %v210, %v585
    %v587 = vpop.f32.mrf.mxu0
    %v588 = vadd.f32 %v214, %v587
    %589 = vdwg.mxu0
    %590 = vmatprep.subr.bf16.mxu0 %v450
    %591 = vmatpush1.bf16.msra.mxu0 %v449
    %592 = vmatprep.subr.bf16.mxu0 %v446
    %593 = vmatpush1.bf16.msra.mxu0 %v445
    %594 = vmatprep.subr.bf16.mxu0 %v442
    %595 = vmatpush1.bf16.msra.mxu0 %v441
    %596 = vmatprep.subr.bf16.mxu0 %v438
    %597 = vmatpush1.bf16.msra.mxu0 %v437
    %598 = vmatprep.subr.bf16.mxu0 %v434
    %599 = vmatpush1.bf16.msra.mxu0 %v433
    %600 = vmatprep.subr.bf16.mxu0 %v430
    %601 = vmatpush1.bf16.msra.mxu0 %v429
    %602 = vmatprep.subr.bf16.mxu0 %v426
    %603 = vmatpush1.bf16.msra.mxu0 %v425
    %604 = vmatprep.subr.bf16.mxu0 %v422
    %605 = vmatpush1.bf16.msra.mxu0 %v421
    %606 = vmatprep.subr.bf16.mxu0 %v482
    %607 = vmatpush2.bf16.msra.mxu0 %v481
    %608 = vmatprep.subr.bf16.mxu0 %v478
    %609 = vmatpush2.bf16.msra.mxu0 %v477
    %610 = vmatprep.subr.bf16.mxu0 %v474
    %611 = vmatpush2.bf16.msra.mxu0 %v473
    %612 = vmatprep.subr.bf16.mxu0 %v470
    %613 = vmatpush2.bf16.msra.mxu0 %v469
    %614 = vmatprep.subr.bf16.mxu0 %v466
    %615 = vmatpush2.bf16.msra.mxu0 %v465
    %616 = vmatprep.subr.bf16.mxu0 %v462
    %617 = vmatpush2.bf16.msra.mxu0 %v461
    %618 = vmatprep.subr.bf16.mxu0 %v458
    %619 = vmatpush2.bf16.msra.mxu0 %v457
    %620 = vmatprep.subr.bf16.mxu0 %v454
    %621 = vmatpush2.bf16.msra.mxu0 %v453
    %622 = vmatprep.mubr.bf16.mxu0 %v140
    %623 = vmatmul.mubr.bf16.gmra.mxu0 %v139
    %v624 = vpop.f32.mrf.mxu0
    %v625 = vadd.f32 %v218, %v624
    %v626 = vpop.f32.mrf.mxu0
    %v627 = vadd.f32 %v222, %v626
    %v628 = vpop.f32.mrf.mxu0
    %v629 = vadd.f32 %v218, %v628
    %v630 = vpop.f32.mrf.mxu0
    %v631 = vadd.f32 %v222, %v630
    %632 = vdwg.mxu0
    %vm633 = vcmp.ge.f32.partialorder %v582, 0.0
    %vm634 = vcmp.ge.f32.partialorder %v584, 0.0
    %vm635 = vcmp.ge.f32.partialorder %v625, 0.0
    %vm636 = vcmp.ge.f32.partialorder %v627, 0.0
    %vm637 = vcmp.ge.f32.partialorder %v586, 0.0
    %vm638 = vcmp.ge.f32.partialorder %v588, 0.0
    %vm639 = vcmp.ge.f32.partialorder %v629, 0.0
    %vm640 = vcmp.ge.f32.partialorder %v631, 0.0
    %v641 = vstv %s131
    %v642 = vmul.f32 %v641, %v582
    %v643 = vmul.f32 %v641, %v584
    %v644 = vmul.f32 %v641, %v625
    %v645 = vmul.f32 %v641, %v627
    %v646 = vmul.f32 %v641, %v586
    %v647 = vmul.f32 %v641, %v588
    %v648 = vmul.f32 %v641, %v629
    %v649 = vmul.f32 %v641, %v631
    %v650 = vsel %vm633, %v582, %v642
    %v651 = vsel %vm634, %v584, %v643
    %v652 = vsel %vm635, %v625, %v644
    %v653 = vsel %vm636, %v627, %v645
    %v654 = vsel %vm637, %v586, %v646
    %v655 = vsel %vm638, %v588, %v647
    %v656 = vsel %vm639, %v629, %v648
    %v657 = vsel %vm640, %v631, %v649
    %v658 = vpack.c.bf16 %v654, %v650
    %v659 = vpack.c.bf16 %v655, %v651
    %v660 = vpack.c.bf16 %v656, %v652
    %v661 = vpack.c.bf16 %v657, %v653
    %v662 = vld [vmem:[#allocation9] sm:$0xf]
    %v663 = vld [vmem:[#allocation9 + $0x4] sm:$0xf]
    %v664 = vld [vmem:[#allocation9 + $0x8] sm:$0xf]
    %v665 = vld [vmem:[#allocation9 + $0xc] sm:$0xf]
    %v666 = vld [vmem:[#allocation9 + $0x10] sm:$0xf]
    %v667 = vld [vmem:[#allocation9 + $0x14] sm:$0xf]
    %v668 = vld [vmem:[#allocation9 + $0x18] sm:$0xf]
    %v669 = vld [vmem:[#allocation9 + $0x1c] sm:$0xf]
    %v670 = vld [vmem:[#allocation9 + $0x20] sm:$0xf]
    %v671 = vld [vmem:[#allocation9 + $0x24] sm:$0xf]
    %v672 = vld [vmem:[#allocation9 + $0x28] sm:$0xf]
    %v673 = vld [vmem:[#allocation9 + $0x2c] sm:$0xf]
    %v674 = vld [vmem:[#allocation9 + $0x30] sm:$0xf]
    %v675 = vld [vmem:[#allocation9 + $0x34] sm:$0xf]
    %v676 = vld [vmem:[#allocation9 + $0x38] sm:$0xf]
    %v677 = vld [vmem:[#allocation9 + $0x3c] sm:$0xf]
    %v678 = vld [vmem:[#allocation9 + $0x40] sm:$0xf]
    %v679 = vld [vmem:[#allocation9 + $0x44] sm:$0xf]
    %v680 = vld [vmem:[#allocation9 + $0x48] sm:$0xf]
    %v681 = vld [vmem:[#allocation9 + $0x4c] sm:$0xf]
    %v682 = vld [vmem:[#allocation9 + $0x50] sm:$0xf]
    %v683 = vld [vmem:[#allocation9 + $0x54] sm:$0xf]
    %v684 = vld [vmem:[#allocation9 + $0x58] sm:$0xf]
    %v685 = vld [vmem:[#allocation9 + $0x5c] sm:$0xf]
    %v686 = vld [vmem:[#allocation9 + $0x60] sm:$0xf]
    %v687 = vld [vmem:[#allocation9 + $0x64] sm:$0xf]
    %v688 = vld [vmem:[#allocation9 + $0x68] sm:$0xf]
    %v689 = vld [vmem:[#allocation9 + $0x6c] sm:$0xf]
    %v690 = vld [vmem:[#allocation9 + $0x70] sm:$0xf]
    %v691 = vld [vmem:[#allocation9 + $0x74] sm:$0xf]
    %v692 = vld [vmem:[#allocation9 + $0x78] sm:$0xf]
    %v693 = vld [vmem:[#allocation9 + $0x7c] sm:$0xf]
    %v694 = vld [vmem:[#allocation9 + $0x80] sm:$0xf]
    %v695 = vld [vmem:[#allocation9 + $0x84] sm:$0xf]
    %v696 = vld [vmem:[#allocation9 + $0x88] sm:$0xf]
    %v697 = vld [vmem:[#allocation9 + $0x8c] sm:$0xf]
    %v698 = vld [vmem:[#allocation9 + $0x90] sm:$0xf]
    %v699 = vld [vmem:[#allocation9 + $0x94] sm:$0xf]
    %v700 = vld [vmem:[#allocation9 + $0x98] sm:$0xf]
    %v701 = vld [vmem:[#allocation9 + $0x9c] sm:$0xf]
    %v702 = vld [vmem:[#allocation9 + $0xa0] sm:$0xf]
    %v703 = vld [vmem:[#allocation9 + $0xa4] sm:$0xf]
    %v704 = vld [vmem:[#allocation9 + $0xa8] sm:$0xf]
    %v705 = vld [vmem:[#allocation9 + $0xac] sm:$0xf]
    %v706 = vld [vmem:[#allocation9 + $0xb0] sm:$0xf]
    %v707 = vld [vmem:[#allocation9 + $0xb4] sm:$0xf]
    %v708 = vld [vmem:[#allocation9 + $0xb8] sm:$0xf]
    %v709 = vld [vmem:[#allocation9 + $0xbc] sm:$0xf]
    %v710 = vld [vmem:[#allocation9 + $0xc0] sm:$0xf]
    %v711 = vld [vmem:[#allocation9 + $0xc4] sm:$0xf]
    %v712 = vld [vmem:[#allocation9 + $0xc8] sm:$0xf]
    %v713 = vld [vmem:[#allocation9 + $0xcc] sm:$0xf]
    %v714 = vld [vmem:[#allocation9 + $0xd0] sm:$0xf]
    %v715 = vld [vmem:[#allocation9 + $0xd4] sm:$0xf]
    %v716 = vld [vmem:[#allocation9 + $0xd8] sm:$0xf]
    %v717 = vld [vmem:[#allocation9 + $0xdc] sm:$0xf]
    %v718 = vld [vmem:[#allocation9 + $0xe0] sm:$0xf]
    %v719 = vld [vmem:[#allocation9 + $0xe4] sm:$0xf]
    %v720 = vld [vmem:[#allocation9 + $0xe8] sm:$0xf]
    %v721 = vld [vmem:[#allocation9 + $0xec] sm:$0xf]
    %v722 = vld [vmem:[#allocation9 + $0xf0] sm:$0xf]
    %v723 = vld [vmem:[#allocation9 + $0xf4] sm:$0xf]
    %v724 = vld [vmem:[#allocation9 + $0xf8] sm:$0xf]
    %v725 = vld [vmem:[#allocation9 + $0xfc] sm:$0xf]
    %v726 = vld [vmem:[#allocation10] sm:$0x1]
    %v728 = vlaneseq
    %v729 = vshrl.u32 %v728, 7
    %v730 = vsub.s32 0, %v729
    %v731 = vrot.slane %v726, %v730
    %v797 = vunpack.c.l.b16 %v662
    %v798 = vunpack.c.l.b16 %v663
    %v799 = vunpack.c.l.b16 %v664
    %v800 = vunpack.c.l.b16 %v665
    %v801 = vunpack.c.l.b16 %v666
    %v802 = vunpack.c.l.b16 %v667
    %v803 = vunpack.c.l.b16 %v668
    %v804 = vunpack.c.l.b16 %v669
    %v805 = vunpack.c.l.b16 %v670
    %v806 = vunpack.c.l.b16 %v671
    %v807 = vunpack.c.l.b16 %v672
    %v808 = vunpack.c.l.b16 %v673
    %v809 = vunpack.c.l.b16 %v674
    %v810 = vunpack.c.l.b16 %v675
    %v811 = vunpack.c.l.b16 %v676
    %v812 = vunpack.c.l.b16 %v677
    %v813 = vunpack.c.l.b16 %v678
    %v814 = vunpack.c.l.b16 %v679
    %v815 = vunpack.c.l.b16 %v680
    %v816 = vunpack.c.l.b16 %v681
    %v817 = vunpack.c.l.b16 %v682
    %v818 = vunpack.c.l.b16 %v683
    %v819 = vunpack.c.l.b16 %v684
    %v820 = vunpack.c.l.b16 %v685
    %v821 = vunpack.c.l.b16 %v686
    %v822 = vunpack.c.l.b16 %v687
    %v823 = vunpack.c.l.b16 %v688
    %v824 = vunpack.c.l.b16 %v689
    %v825 = vunpack.c.l.b16 %v690
    %v826 = vunpack.c.l.b16 %v691
    %v827 = vunpack.c.l.b16 %v692
    %v828 = vunpack.c.l.b16 %v693
    %v829 = vunpack.c.l.b16 %v694
    %v830 = vunpack.c.l.b16 %v695
    %v831 = vunpack.c.l.b16 %v696
    %v832 = vunpack.c.l.b16 %v697
    %v833 = vunpack.c.l.b16 %v698
    %v834 = vunpack.c.l.b16 %v699
    %v835 = vunpack.c.l.b16 %v700
    %v836 = vunpack.c.l.b16 %v701
    %v837 = vunpack.c.l.b16 %v702
    %v838 = vunpack.c.l.b16 %v703
    %v839 = vunpack.c.l.b16 %v704
    %v840 = vunpack.c.l.b16 %v705
    %v841 = vunpack.c.l.b16 %v706
    %v842 = vunpack.c.l.b16 %v707
    %v843 = vunpack.c.l.b16 %v708
    %v844 = vunpack.c.l.b16 %v709
    %v845 = vunpack.c.l.b16 %v710
    %v846 = vunpack.c.l.b16 %v711
    %v847 = vunpack.c.l.b16 %v712
    %v848 = vunpack.c.l.b16 %v713
    %v849 = vunpack.c.l.b16 %v714
    %v850 = vunpack.c.l.b16 %v715
    %v851 = vunpack.c.l.b16 %v716
    %v852 = vunpack.c.l.b16 %v717
    %v853 = vunpack.c.l.b16 %v718
    %v854 = vunpack.c.l.b16 %v719
    %v855 = vunpack.c.l.b16 %v720
    %v856 = vunpack.c.l.b16 %v721
    %v857 = vunpack.c.l.b16 %v722
    %v858 = vunpack.c.l.b16 %v723
    %v859 = vunpack.c.l.b16 %v724
    %v860 = vunpack.c.l.b16 %v725
    %v861 = vpack.c.b16 %v798, %v797
    %v862 = vpack.c.b16 %v800, %v799
    %v863 = vpack.c.b16 %v802, %v801
    %v864 = vpack.c.b16 %v804, %v803
    %v865 = vpack.c.b16 %v806, %v805
    %v866 = vpack.c.b16 %v808, %v807
    %v867 = vpack.c.b16 %v810, %v809
    %v868 = vpack.c.b16 %v812, %v811
    %v869 = vpack.c.b16 %v814, %v813
    %v870 = vpack.c.b16 %v816, %v815
    %v871 = vpack.c.b16 %v818, %v817
    %v872 = vpack.c.b16 %v820, %v819
    %v873 = vpack.c.b16 %v822, %v821
    %v874 = vpack.c.b16 %v824, %v823
    %v875 = vpack.c.b16 %v826, %v825
    %v876 = vpack.c.b16 %v828, %v827
    %v877 = vpack.c.b16 %v830, %v829
    %v878 = vpack.c.b16 %v832, %v831
    %v879 = vpack.c.b16 %v834, %v833
    %v880 = vpack.c.b16 %v836, %v835
    %v881 = vpack.c.b16 %v838, %v837
    %v882 = vpack.c.b16 %v840, %v839
    %v883 = vpack.c.b16 %v842, %v841
    %v884 = vpack.c.b16 %v844, %v843
    %v885 = vpack.c.b16 %v846, %v845
    %v886 = vpack.c.b16 %v848, %v847
    %v887 = vpack.c.b16 %v850, %v849
    %v888 = vpack.c.b16 %v852, %v851
    %v889 = vpack.c.b16 %v854, %v853
    %v890 = vpack.c.b16 %v856, %v855
    %v891 = vpack.c.b16 %v858, %v857
    %v892 = vpack.c.b16 %v860, %v859
    %925 = vmatprep.subr.bf16.mxu0 0
    %926 = vmatpush1.bf16.msra.mxu0 %v868
    %927 = vmatprep.subr.bf16.mxu0 0
    %928 = vmatpush1.bf16.msra.mxu0 %v867
    %929 = vmatprep.subr.bf16.mxu0 0
    %930 = vmatpush1.bf16.msra.mxu0 %v866
    %931 = vmatprep.subr.bf16.mxu0 0
    %932 = vmatpush1.bf16.msra.mxu0 %v865
    %933 = vmatprep.subr.bf16.mxu0 0
    %934 = vmatpush1.bf16.msra.mxu0 %v864
    %935 = vmatprep.subr.bf16.mxu0 0
    %936 = vmatpush1.bf16.msra.mxu0 %v863
    %937 = vmatprep.subr.bf16.mxu0 0
    %938 = vmatpush1.bf16.msra.mxu0 %v862
    %939 = vmatprep.subr.bf16.mxu0 0
    %940 = vmatpush1.bf16.msra.mxu0 %v861
    %941 = vmatprep.subr.bf16.mxu0 0
    %942 = vmatpush2.bf16.msra.mxu0 %v876
    %943 = vmatprep.subr.bf16.mxu0 0
    %944 = vmatpush2.bf16.msra.mxu0 %v875
    %945 = vmatprep.subr.bf16.mxu0 0
    %946 = vmatpush2.bf16.msra.mxu0 %v874
    %947 = vmatprep.subr.bf16.mxu0 0
    %948 = vmatpush2.bf16.msra.mxu0 %v873
    %949 = vmatprep.subr.bf16.mxu0 0
    %950 = vmatpush2.bf16.msra.mxu0 %v872
    %951 = vmatprep.subr.bf16.mxu0 0
    %952 = vmatpush2.bf16.msra.mxu0 %v871
    %953 = vmatprep.subr.bf16.mxu0 0
    %954 = vmatpush2.bf16.msra.mxu0 %v870
    %955 = vmatprep.subr.bf16.mxu0 0
    %956 = vmatpush2.bf16.msra.mxu0 %v869
    %957 = vmatprep.mubr.bf16.mxu0 %v659
    %958 = vmatmul.mubr.bf16.gmra.mxu0 %v658
    %v959 = vpop.f32.mrf.mxu0
    %v960 = vadd.f32 %v731, %v959
    %v961 = vpop.f32.mrf.mxu0
    %v962 = vpop.f32.mrf.mxu0
    %v963 = vadd.f32 %v731, %v962
    %v964 = vpop.f32.mrf.mxu0
    %965 = vdwg.mxu0
    %966 = vmatprep.subr.bf16.mxu0 0
    %967 = vmatpush1.bf16.msra.mxu0 %v884
    %968 = vmatprep.subr.bf16.mxu0 0
    %969 = vmatpush1.bf16.msra.mxu0 %v883
    %970 = vmatprep.subr.bf16.mxu0 0
    %971 = vmatpush1.bf16.msra.mxu0 %v882
    %972 = vmatprep.subr.bf16.mxu0 0
    %973 = vmatpush1.bf16.msra.mxu0 %v881
    %974 = vmatprep.subr.bf16.mxu0 0
    %975 = vmatpush1.bf16.msra.mxu0 %v880
    %976 = vmatprep.subr.bf16.mxu0 0
    %977 = vmatpush1.bf16.msra.mxu0 %v879
    %978 = vmatprep.subr.bf16.mxu0 0
    %979 = vmatpush1.bf16.msra.mxu0 %v878
    %980 = vmatprep.subr.bf16.mxu0 0
    %981 = vmatpush1.bf16.msra.mxu0 %v877
    %982 = vmatprep.subr.bf16.mxu0 0
    %983 = vmatpush2.bf16.msra.mxu0 %v892
    %984 = vmatprep.subr.bf16.mxu0 0
    %985 = vmatpush2.bf16.msra.mxu0 %v891
    %986 = vmatprep.subr.bf16.mxu0 0
    %987 = vmatpush2.bf16.msra.mxu0 %v890
    %988 = vmatprep.subr.bf16.mxu0 0
    %989 = vmatpush2.bf16.msra.mxu0 %v889
    %990 = vmatprep.subr.bf16.mxu0 0
    %991 = vmatpush2.bf16.msra.mxu0 %v888
    %992 = vmatprep.subr.bf16.mxu0 0
    %993 = vmatpush2.bf16.msra.mxu0 %v887
    %994 = vmatprep.subr.bf16.mxu0 0
    %995 = vmatpush2.bf16.msra.mxu0 %v886
    %996 = vmatprep.subr.bf16.mxu0 0
    %997 = vmatpush2.bf16.msra.mxu0 %v885
    %998 = vmatprep.mubr.bf16.mxu0 %v661
    %999 = vmatmul.mubr.bf16.gmra.mxu0 %v660
    %v1000 = vpop.f32.mrf.mxu0
    %v1001 = vadd.f32 %v960, %v1000
    %v1002 = vpop.f32.mrf.mxu0
    %v1003 = vpop.f32.mrf.mxu0
    %v1004 = vadd.f32 %v963, %v1003
    %v1005 = vpop.f32.mrf.mxu0
    %1006 = vdwg.mxu0
    %vm1007 = vcmp.ge.f32.partialorder %v1001, 0.0
    %vm1008 = vcmp.ge.f32.partialorder %v1004, 0.0
    %v1009 = vstv %s132
    %v1010 = vmul.f32 %v1009, %v1001
    %v1011 = vmul.f32 %v1009, %v1004
    %v1012 = vsel %vm1007, %v1001, %v1010
    %v1013 = vsel %vm1008, %v1004, %v1011
    %v1014 = vpack.c.bf16 %v1013, %v1012
    %v1015 = vld [vmem:[#allocation12] sm:$0xff]
    %v1016 = vld [vmem:[#allocation12 + $0x8] sm:$0xff]
    %v1017 = vld [vmem:[#allocation12 + $0x10] sm:$0xff]
    %v1018 = vld [vmem:[#allocation12 + $0x18] sm:$0xff]
    %v1019 = vld [vmem:[#allocation12 + $0x20] sm:$0xff]
    %v1020 = vld [vmem:[#allocation12 + $0x28] sm:$0xff]
    %v1021 = vld [vmem:[#allocation12 + $0x30] sm:$0xff]
    %v1022 = vld [vmem:[#allocation12 + $0x38] sm:$0xff]
    %v1023 = vld [vmem:[#allocation12 + $0x40] sm:$0xff]
    %v1024 = vld [vmem:[#allocation12 + $0x48] sm:$0xff]
    %v1025 = vld [vmem:[#allocation12 + $0x50] sm:$0xff]
    %v1026 = vld [vmem:[#allocation12 + $0x58] sm:$0xff]
    %v1027 = vld [vmem:[#allocation12 + $0x60] sm:$0xff]
    %v1028 = vld [vmem:[#allocation12 + $0x68] sm:$0xff]
    %v1029 = vld [vmem:[#allocation12 + $0x70] sm:$0xff]
    %v1030 = vld [vmem:[#allocation12 + $0x78] sm:$0xff]
    %v1031 = vld [vmem:[#allocation12 + $0x80] sm:$0xff]
    %v1032 = vld [vmem:[#allocation12 + $0x88] sm:$0xff]
    %v1033 = vld [vmem:[#allocation12 + $0x90] sm:$0xff]
    %v1034 = vld [vmem:[#allocation12 + $0x98] sm:$0xff]
    %v1035 = vld [vmem:[#allocation12 + $0xa0] sm:$0xff]
    %v1036 = vld [vmem:[#allocation12 + $0xa8] sm:$0xff]
    %v1037 = vld [vmem:[#allocation12 + $0xb0] sm:$0xff]
    %v1038 = vld [vmem:[#allocation12 + $0xb8] sm:$0xff]
    %v1039 = vld [vmem:[#allocation12 + $0xc0] sm:$0xff]
    %v1040 = vld [vmem:[#allocation12 + $0xc8] sm:$0xff]
    %v1041 = vld [vmem:[#allocation12 + $0xd0] sm:$0xff]
    %v1042 = vld [vmem:[#allocation12 + $0xd8] sm:$0xff]
    %v1043 = vld [vmem:[#allocation12 + $0xe0] sm:$0xff]
    %v1044 = vld [vmem:[#allocation12 + $0xe8] sm:$0xff]
    %v1045 = vld [vmem:[#allocation12 + $0xf0] sm:$0xff]
    %v1046 = vld [vmem:[#allocation12 + $0xf8] sm:$0xff]
    %v1047 = vld [vmem:[%s7] sm:$0xf]
    %v1049 = vlaneseq
    %v1050 = vshrl.u32 %v1049, 7
    %v1051 = vsub.s32 0, %v1050
    %v1052 = vrot.slane %v1047, %v1051
    %v1053 = vlaneseq
    %v1054 = vshrl.u32 %v1053, 7
    %v1055 = vsub.s32 1, %v1054
    %v1056 = vrot.slane %v1047, %v1055
    %v1057 = vlaneseq
    %v1058 = vshrl.u32 %v1057, 7
    %v1059 = vsub.s32 2, %v1058
    %v1060 = vrot.slane %v1047, %v1059
    %v1061 = vlaneseq
    %v1062 = vshrl.u32 %v1061, 7
    %v1063 = vsub.s32 3, %v1062
    %v1064 = vrot.slane %v1047, %v1063
    %v1101 = vunpack.c.l.b16 %v1015
    %v1102 = vunpack.c.h.b16 %v1015
    %v1103 = vunpack.c.l.b16 %v1016
    %v1104 = vunpack.c.h.b16 %v1016
    %v1105 = vunpack.c.l.b16 %v1017
    %v1106 = vunpack.c.h.b16 %v1017
    %v1107 = vunpack.c.l.b16 %v1018
    %v1108 = vunpack.c.h.b16 %v1018
    %v1109 = vunpack.c.l.b16 %v1019
    %v1110 = vunpack.c.h.b16 %v1019
    %v1111 = vunpack.c.l.b16 %v1020
    %v1112 = vunpack.c.h.b16 %v1020
    %v1113 = vunpack.c.l.b16 %v1021
    %v1114 = vunpack.c.h.b16 %v1021
    %v1115 = vunpack.c.l.b16 %v1022
    %v1116 = vunpack.c.h.b16 %v1022
    %v1117 = vunpack.c.l.b16 %v1023
    %v1118 = vunpack.c.h.b16 %v1023
    %v1119 = vunpack.c.l.b16 %v1024
    %v1120 = vunpack.c.h.b16 %v1024
    %v1121 = vunpack.c.l.b16 %v1025
    %v1122 = vunpack.c.h.b16 %v1025
    %v1123 = vunpack.c.l.b16 %v1026
    %v1124 = vunpack.c.h.b16 %v1026
    %v1125 = vunpack.c.l.b16 %v1027
    %v1126 = vunpack.c.h.b16 %v1027
    %v1127 = vunpack.c.l.b16 %v1028
    %v1128 = vunpack.c.h.b16 %v1028
    %v1129 = vunpack.c.l.b16 %v1029
    %v1130 = vunpack.c.h.b16 %v1029
    %v1131 = vunpack.c.l.b16 %v1030
    %v1132 = vunpack.c.h.b16 %v1030
    %v1133 = vunpack.c.l.b16 %v1031
    %v1134 = vunpack.c.h.b16 %v1031
    %v1135 = vunpack.c.l.b16 %v1032
    %v1136 = vunpack.c.h.b16 %v1032
    %v1137 = vunpack.c.l.b16 %v1033
    %v1138 = vunpack.c.h.b16 %v1033
    %v1139 = vunpack.c.l.b16 %v1034
    %v1140 = vunpack.c.h.b16 %v1034
    %v1141 = vunpack.c.l.b16 %v1035
    %v1142 = vunpack.c.h.b16 %v1035
    %v1143 = vunpack.c.l.b16 %v1036
    %v1144 = vunpack.c.h.b16 %v1036
    %v1145 = vunpack.c.l.b16 %v1037
    %v1146 = vunpack.c.h.b16 %v1037
    %v1147 = vunpack.c.l.b16 %v1038
    %v1148 = vunpack.c.h.b16 %v1038
    %v1149 = vunpack.c.l.b16 %v1039
    %v1150 = vunpack.c.h.b16 %v1039
    %v1151 = vunpack.c.l.b16 %v1040
    %v1152 = vunpack.c.h.b16 %v1040
    %v1153 = vunpack.c.l.b16 %v1041
    %v1154 = vunpack.c.h.b16 %v1041
    %v1155 = vunpack.c.l.b16 %v1042
    %v1156 = vunpack.c.h.b16 %v1042
    %v1157 = vunpack.c.l.b16 %v1043
    %v1158 = vunpack.c.h.b16 %v1043
    %v1159 = vunpack.c.l.b16 %v1044
    %v1160 = vunpack.c.h.b16 %v1044
    %v1161 = vunpack.c.l.b16 %v1045
    %v1162 = vunpack.c.h.b16 %v1045
    %v1163 = vunpack.c.l.b16 %v1046
    %v1164 = vunpack.c.h.b16 %v1046
    %v1165 = vpack.c.b16 %v1105, %v1101
    %v1166 = vpack.c.b16 %v1106, %v1102
    %v1167 = vpack.c.b16 %v1107, %v1103
    %v1168 = vpack.c.b16 %v1108, %v1104
    %v1169 = vpack.c.b16 %v1113, %v1109
    %v1170 = vpack.c.b16 %v1114, %v1110
    %v1171 = vpack.c.b16 %v1115, %v1111
    %v1172 = vpack.c.b16 %v1116, %v1112
    %v1173 = vpack.c.b16 %v1121, %v1117
    %v1174 = vpack.c.b16 %v1122, %v1118
    %v1175 = vpack.c.b16 %v1123, %v1119
    %v1176 = vpack.c.b16 %v1124, %v1120
    %v1177 = vpack.c.b16 %v1129, %v1125
    %v1178 = vpack.c.b16 %v1130, %v1126
    %v1179 = vpack.c.b16 %v1131, %v1127
    %v1180 = vpack.c.b16 %v1132, %v1128
    %v1181 = vpack.c.b16 %v1137, %v1133
    %v1182 = vpack.c.b16 %v1138, %v1134
    %v1183 = vpack.c.b16 %v1139, %v1135
    %v1184 = vpack.c.b16 %v1140, %v1136
    %v1185 = vpack.c.b16 %v1145, %v1141
    %v1186 = vpack.c.b16 %v1146, %v1142
    %v1187 = vpack.c.b16 %v1147, %v1143
    %v1188 = vpack.c.b16 %v1148, %v1144
    %v1189 = vpack.c.b16 %v1153, %v1149
    %v1190 = vpack.c.b16 %v1154, %v1150
    %v1191 = vpack.c.b16 %v1155, %v1151
    %v1192 = vpack.c.b16 %v1156, %v1152
    %v1193 = vpack.c.b16 %v1161, %v1157
    %v1194 = vpack.c.b16 %v1162, %v1158
    %v1195 = vpack.c.b16 %v1163, %v1159
    %v1196 = vpack.c.b16 %v1164, %v1160
    %1229 = vmatprep.subr.bf16.mxu0 %v1194
    %1230 = vmatpush1.bf16.msra.mxu0 %v1193
    %1231 = vmatprep.subr.bf16.mxu0 %v1190
    %1232 = vmatpush1.bf16.msra.mxu0 %v1189
    %1233 = vmatprep.subr.bf16.mxu0 %v1186
    %1234 = vmatpush1.bf16.msra.mxu0 %v1185
    %1235 = vmatprep.subr.bf16.mxu0 %v1182
    %1236 = vmatpush1.bf16.msra.mxu0 %v1181
    %1237 = vmatprep.subr.bf16.mxu0 %v1178
    %1238 = vmatpush1.bf16.msra.mxu0 %v1177
    %1239 = vmatprep.subr.bf16.mxu0 %v1174
    %1240 = vmatpush1.bf16.msra.mxu0 %v1173
    %1241 = vmatprep.subr.bf16.mxu0 %v1170
    %1242 = vmatpush1.bf16.msra.mxu0 %v1169
    %1243 = vmatprep.subr.bf16.mxu0 %v1166
    %1244 = vmatpush1.bf16.msra.mxu0 %v1165
    %1245 = vmatprep.subr.bf16.mxu0 0
    %1246 = vmatpush2.bf16.msra.mxu0 0
    %1247 = vmatprep.subr.bf16.mxu0 0
    %1248 = vmatpush2.bf16.msra.mxu0 0
    %1249 = vmatprep.subr.bf16.mxu0 0
    %1250 = vmatpush2.bf16.msra.mxu0 0
    %1251 = vmatprep.subr.bf16.mxu0 0
    %1252 = vmatpush2.bf16.msra.mxu0 0
    %1253 = vmatprep.subr.bf16.mxu0 0
    %1254 = vmatpush2.bf16.msra.mxu0 0
    %1255 = vmatprep.subr.bf16.mxu0 0
    %1256 = vmatpush2.bf16.msra.mxu0 0
    %1257 = vmatprep.subr.bf16.mxu0 0
    %1258 = vmatpush2.bf16.msra.mxu0 0
    %1259 = vmatprep.subr.bf16.mxu0 0
    %1260 = vmatpush2.bf16.msra.mxu0 0
    %1261 = vmatprep.mubr.bf16.mxu0 0
    %1262 = vmatmul.mubr.bf16.gmra.mxu0 %v1014
    %v1263 = vpop.f32.mrf.mxu0
    %v1264 = vadd.f32 %v1052, %v1263
    %v1265 = vpop.f32.mrf.mxu0
    %v1266 = vadd.f32 %v1056, %v1265
    %v1267 = vpop.f32.mrf.mxu0
    %v1268 = vadd.f32 %v1052, %v1267
    %v1269 = vpop.f32.mrf.mxu0
    %v1270 = vadd.f32 %v1056, %v1269
    %1271 = vdwg.mxu0
    %1272 = vmatprep.subr.bf16.mxu0 %v1196
    %1273 = vmatpush1.bf16.msra.mxu0 %v1195
    %1274 = vmatprep.subr.bf16.mxu0 %v1192
    %1275 = vmatpush1.bf16.msra.mxu0 %v1191
    %1276 = vmatprep.subr.bf16.mxu0 %v1188
    %1277 = vmatpush1.bf16.msra.mxu0 %v1187
    %1278 = vmatprep.subr.bf16.mxu0 %v1184
    %1279 = vmatpush1.bf16.msra.mxu0 %v1183
    %1280 = vmatprep.subr.bf16.mxu0 %v1180
    %1281 = vmatpush1.bf16.msra.mxu0 %v1179
    %1282 = vmatprep.subr.bf16.mxu0 %v1176
    %1283 = vmatpush1.bf16.msra.mxu0 %v1175
    %1284 = vmatprep.subr.bf16.mxu0 %v1172
    %1285 = vmatpush1.bf16.msra.mxu0 %v1171
    %1286 = vmatprep.subr.bf16.mxu0 %v1168
    %1287 = vmatpush1.bf16.msra.mxu0 %v1167
    %1288 = vmatprep.subr.bf16.mxu0 0
    %1289 = vmatpush2.bf16.msra.mxu0 0
    %1290 = vmatprep.subr.bf16.mxu0 0
    %1291 = vmatpush2.bf16.msra.mxu0 0
    %1292 = vmatprep.subr.bf16.mxu0 0
    %1293 = vmatpush2.bf16.msra.mxu0 0
    %1294 = vmatprep.subr.bf16.mxu0 0
    %1295 = vmatpush2.bf16.msra.mxu0 0
    %1296 = vmatprep.subr.bf16.mxu0 0
    %1297 = vmatpush2.bf16.msra.mxu0 0
    %1298 = vmatprep.subr.bf16.mxu0 0
    %1299 = vmatpush2.bf16.msra.mxu0 0
    %1300 = vmatprep.subr.bf16.mxu0 0
    %1301 = vmatpush2.bf16.msra.mxu0 0
    %1302 = vmatprep.subr.bf16.mxu0 0
    %1303 = vmatpush2.bf16.msra.mxu0 0
    %1304 = vmatprep.mubr.bf16.mxu0 0
    %1305 = vmatmul.mubr.bf16.gmra.mxu0 %v1014
    %v1306 = vpop.f32.mrf.mxu0
    %v1307 = vadd.f32 %v1060, %v1306
    %v1308 = vpop.f32.mrf.mxu0
    %v1309 = vadd.f32 %v1064, %v1308
    %v1310 = vpop.f32.mrf.mxu0
    %v1311 = vadd.f32 %v1060, %v1310
    %v1312 = vpop.f32.mrf.mxu0
    %v1313 = vadd.f32 %v1064, %v1312
    %1314 = vdwg.mxu0
    %vm1315 = vcmp.ge.f32.partialorder %v1264, 0.0
    %vm1316 = vcmp.ge.f32.partialorder %v1266, 0.0
    %vm1317 = vcmp.ge.f32.partialorder %v1307, 0.0
    %vm1318 = vcmp.ge.f32.partialorder %v1309, 0.0
    %vm1319 = vcmp.ge.f32.partialorder %v1268, 0.0
    %vm1320 = vcmp.ge.f32.partialorder %v1270, 0.0
    %vm1321 = vcmp.ge.f32.partialorder %v1311, 0.0
    %vm1322 = vcmp.ge.f32.partialorder %v1313, 0.0
    %v1323 = vstv %s133
    %v1324 = vmul.f32 %v1323, %v1264
    %v1325 = vmul.f32 %v1323, %v1266
    %v1326 = vmul.f32 %v1323, %v1307
    %v1327 = vmul.f32 %v1323, %v1309
    %v1328 = vmul.f32 %v1323, %v1268
    %v1329 = vmul.f32 %v1323, %v1270
    %v1330 = vmul.f32 %v1323, %v1311
    %v1331 = vmul.f32 %v1323, %v1313
    %v1332 = vsel %vm1315, %v1264, %v1324
    %v1333 = vsel %vm1316, %v1266, %v1325
    %v1334 = vsel %vm1317, %v1307, %v1326
    %v1335 = vsel %vm1318, %v1309, %v1327
    %v1336 = vsel %vm1319, %v1268, %v1328
    %v1337 = vsel %vm1320, %v1270, %v1329
    %v1338 = vsel %vm1321, %v1311, %v1330
    %v1339 = vsel %vm1322, %v1313, %v1331
    %v1340 = vpack.c.bf16 %v1336, %v1332
    %v1341 = vpack.c.bf16 %v1337, %v1333
    %v1342 = vpack.c.bf16 %v1338, %v1334
    %v1343 = vpack.c.bf16 %v1339, %v1335
    %v1344 = vld [vmem:[#allocation13] sm:$0xff]
    %v1345 = vld [vmem:[#allocation13 + $0x8] sm:$0xff]
    %v1346 = vld [vmem:[#allocation13 + $0x10] sm:$0xff]
    %v1347 = vld [vmem:[#allocation13 + $0x18] sm:$0xff]
    %v1348 = vld [vmem:[#allocation13 + $0x20] sm:$0xff]
    %v1349 = vld [vmem:[#allocation13 + $0x28] sm:$0xff]
    %v1350 = vld [vmem:[#allocation13 + $0x30] sm:$0xff]
    %v1351 = vld [vmem:[#allocation13 + $0x38] sm:$0xff]
    %v1352 = vld [vmem:[#allocation13 + $0x40] sm:$0xff]
    %v1353 = vld [vmem:[#allocation13 + $0x48] sm:$0xff]
    %v1354 = vld [vmem:[#allocation13 + $0x50] sm:$0xff]
    %v1355 = vld [vmem:[#allocation13 + $0x58] sm:$0xff]
    %v1356 = vld [vmem:[#allocation13 + $0x60] sm:$0xff]
    %v1357 = vld [vmem:[#allocation13 + $0x68] sm:$0xff]
    %v1358 = vld [vmem:[#allocation13 + $0x70] sm:$0xff]
    %v1359 = vld [vmem:[#allocation13 + $0x78] sm:$0xff]
    %v1360 = vld [vmem:[#allocation13 + $0x80] sm:$0xff]
    %v1361 = vld [vmem:[#allocation13 + $0x88] sm:$0xff]
    %v1362 = vld [vmem:[#allocation13 + $0x90] sm:$0xff]
    %v1363 = vld [vmem:[#allocation13 + $0x98] sm:$0xff]
    %v1364 = vld [vmem:[#allocation13 + $0xa0] sm:$0xff]
    %v1365 = vld [vmem:[#allocation13 + $0xa8] sm:$0xff]
    %v1366 = vld [vmem:[#allocation13 + $0xb0] sm:$0xff]
    %v1367 = vld [vmem:[#allocation13 + $0xb8] sm:$0xff]
    %v1368 = vld [vmem:[#allocation13 + $0xc0] sm:$0xff]
    %v1369 = vld [vmem:[#allocation13 + $0xc8] sm:$0xff]
    %v1370 = vld [vmem:[#allocation13 + $0xd0] sm:$0xff]
    %v1371 = vld [vmem:[#allocation13 + $0xd8] sm:$0xff]
    %v1372 = vld [vmem:[#allocation13 + $0xe0] sm:$0xff]
    %v1373 = vld [vmem:[#allocation13 + $0xe8] sm:$0xff]
    %v1374 = vld [vmem:[#allocation13 + $0xf0] sm:$0xff]
    %v1375 = vld [vmem:[#allocation13 + $0xf8] sm:$0xff]
    %v1376 = vld [vmem:[#allocation13 + $0x100] sm:$0xff]
    %v1377 = vld [vmem:[#allocation13 + $0x108] sm:$0xff]
    %v1378 = vld [vmem:[#allocation13 + $0x110] sm:$0xff]
    %v1379 = vld [vmem:[#allocation13 + $0x118] sm:$0xff]
    %v1380 = vld [vmem:[#allocation13 + $0x120] sm:$0xff]
    %v1381 = vld [vmem:[#allocation13 + $0x128] sm:$0xff]
    %v1382 = vld [vmem:[#allocation13 + $0x130] sm:$0xff]
    %v1383 = vld [vmem:[#allocation13 + $0x138] sm:$0xff]
    %v1384 = vld [vmem:[#allocation13 + $0x140] sm:$0xff]
    %v1385 = vld [vmem:[#allocation13 + $0x148] sm:$0xff]
    %v1386 = vld [vmem:[#allocation13 + $0x150] sm:$0xff]
    %v1387 = vld [vmem:[#allocation13 + $0x158] sm:$0xff]
    %v1388 = vld [vmem:[#allocation13 + $0x160] sm:$0xff]
    %v1389 = vld [vmem:[#allocation13 + $0x168] sm:$0xff]
    %v1390 = vld [vmem:[#allocation13 + $0x170] sm:$0xff]
    %v1391 = vld [vmem:[#allocation13 + $0x178] sm:$0xff]
    %v1392 = vld [vmem:[#allocation13 + $0x180] sm:$0xff]
    %v1393 = vld [vmem:[#allocation13 + $0x188] sm:$0xff]
    %v1394 = vld [vmem:[#allocation13 + $0x190] sm:$0xff]
    %v1395 = vld [vmem:[#allocation13 + $0x198] sm:$0xff]
    %v1396 = vld [vmem:[#allocation13 + $0x1a0] sm:$0xff]
    %v1397 = vld [vmem:[#allocation13 + $0x1a8] sm:$0xff]
    %v1398 = vld [vmem:[#allocation13 + $0x1b0] sm:$0xff]
    %v1399 = vld [vmem:[#allocation13 + $0x1b8] sm:$0xff]
    %v1400 = vld [vmem:[#allocation13 + $0x1c0] sm:$0xff]
    %v1401 = vld [vmem:[#allocation13 + $0x1c8] sm:$0xff]
    %v1402 = vld [vmem:[#allocation13 + $0x1d0] sm:$0xff]
    %v1403 = vld [vmem:[#allocation13 + $0x1d8] sm:$0xff]
    %v1404 = vld [vmem:[#allocation13 + $0x1e0] sm:$0xff]
    %v1405 = vld [vmem:[#allocation13 + $0x1e8] sm:$0xff]
    %v1406 = vld [vmem:[#allocation13 + $0x1f0] sm:$0xff]
    %v1407 = vld [vmem:[#allocation13 + $0x1f8] sm:$0xff]
    %v1408 = vld [vmem:[%s9] sm:$0x3]
    %v1410 = vlaneseq
    %v1411 = vshrl.u32 %v1410, 7
    %v1412 = vsub.s32 0, %v1411
    %v1413 = vrot.slane %v1408, %v1412
    %v1414 = vlaneseq
    %v1415 = vshrl.u32 %v1414, 7
    %v1416 = vsub.s32 1, %v1415
    %v1417 = vrot.slane %v1408, %v1416
    %v1484 = vunpack.c.l.b16 %v1344
    %v1485 = vunpack.c.h.b16 %v1344
    %v1486 = vunpack.c.l.b16 %v1345
    %v1487 = vunpack.c.h.b16 %v1345
    %v1488 = vunpack.c.l.b16 %v1346
    %v1489 = vunpack.c.h.b16 %v1346
    %v1490 = vunpack.c.l.b16 %v1347
    %v1491 = vunpack.c.h.b16 %v1347
    %v1492 = vunpack.c.l.b16 %v1348
    %v1493 = vunpack.c.h.b16 %v1348
    %v1494 = vunpack.c.l.b16 %v1349
    %v1495 = vunpack.c.h.b16 %v1349
    %v1496 = vunpack.c.l.b16 %v1350
    %v1497 = vunpack.c.h.b16 %v1350
    %v1498 = vunpack.c.l.b16 %v1351
    %v1499 = vunpack.c.h.b16 %v1351
    %v1500 = vunpack.c.l.b16 %v1352
    %v1501 = vunpack.c.h.b16 %v1352
    %v1502 = vunpack.c.l.b16 %v1353
    %v1503 = vunpack.c.h.b16 %v1353
    %v1504 = vunpack.c.l.b16 %v1354
    %v1505 = vunpack.c.h.b16 %v1354
    %v1506 = vunpack.c.l.b16 %v1355
    %v1507 = vunpack.c.h.b16 %v1355
    %v1508 = vunpack.c.l.b16 %v1356
    %v1509 = vunpack.c.h.b16 %v1356
    %v1510 = vunpack.c.l.b16 %v1357
    %v1511 = vunpack.c.h.b16 %v1357
    %v1512 = vunpack.c.l.b16 %v1358
    %v1513 = vunpack.c.h.b16 %v1358
    %v1514 = vunpack.c.l.b16 %v1359
    %v1515 = vunpack.c.h.b16 %v1359
    %v1516 = vunpack.c.l.b16 %v1360
    %v1517 = vunpack.c.h.b16 %v1360
    %v1518 = vunpack.c.l.b16 %v1361
    %v1519 = vunpack.c.h.b16 %v1361
    %v1520 = vunpack.c.l.b16 %v1362
    %v1521 = vunpack.c.h.b16 %v1362
    %v1522 = vunpack.c.l.b16 %v1363
    %v1523 = vunpack.c.h.b16 %v1363
    %v1524 = vunpack.c.l.b16 %v1364
    %v1525 = vunpack.c.h.b16 %v1364
    %v1526 = vunpack.c.l.b16 %v1365
    %v1527 = vunpack.c.h.b16 %v1365
    %v1528 = vunpack.c.l.b16 %v1366
    %v1529 = vunpack.c.h.b16 %v1366
    %v1530 = vunpack.c.l.b16 %v1367
    %v1531 = vunpack.c.h.b16 %v1367
    %v1532 = vunpack.c.l.b16 %v1368
    %v1533 = vunpack.c.h.b16 %v1368
    %v1534 = vunpack.c.l.b16 %v1369
    %v1535 = vunpack.c.h.b16 %v1369
    %v1536 = vunpack.c.l.b16 %v1370
    %v1537 = vunpack.c.h.b16 %v1370
    %v1538 = vunpack.c.l.b16 %v1371
    %v1539 = vunpack.c.h.b16 %v1371
    %v1540 = vunpack.c.l.b16 %v1372
    %v1541 = vunpack.c.h.b16 %v1372
    %v1542 = vunpack.c.l.b16 %v1373
    %v1543 = vunpack.c.h.b16 %v1373
    %v1544 = vunpack.c.l.b16 %v1374
    %v1545 = vunpack.c.h.b16 %v1374
    %v1546 = vunpack.c.l.b16 %v1375
    %v1547 = vunpack.c.h.b16 %v1375
    %v1548 = vunpack.c.l.b16 %v1376
    %v1549 = vunpack.c.h.b16 %v1376
    %v1550 = vunpack.c.l.b16 %v1377
    %v1551 = vunpack.c.h.b16 %v1377
    %v1552 = vunpack.c.l.b16 %v1378
    %v1553 = vunpack.c.h.b16 %v1378
    %v1554 = vunpack.c.l.b16 %v1379
    %v1555 = vunpack.c.h.b16 %v1379
    %v1556 = vunpack.c.l.b16 %v1380
    %v1557 = vunpack.c.h.b16 %v1380
    %v1558 = vunpack.c.l.b16 %v1381
    %v1559 = vunpack.c.h.b16 %v1381
    %v1560 = vunpack.c.l.b16 %v1382
    %v1561 = vunpack.c.h.b16 %v1382
    %v1562 = vunpack.c.l.b16 %v1383
    %v1563 = vunpack.c.h.b16 %v1383
    %v1564 = vunpack.c.l.b16 %v1384
    %v1565 = vunpack.c.h.b16 %v1384
    %v1566 = vunpack.c.l.b16 %v1385
    %v1567 = vunpack.c.h.b16 %v1385
    %v1568 = vunpack.c.l.b16 %v1386
    %v1569 = vunpack.c.h.b16 %v1386
    %v1570 = vunpack.c.l.b16 %v1387
    %v1571 = vunpack.c.h.b16 %v1387
    %v1572 = vunpack.c.l.b16 %v1388
    %v1573 = vunpack.c.h.b16 %v1388
    %v1574 = vunpack.c.l.b16 %v1389
    %v1575 = vunpack.c.h.b16 %v1389
    %v1576 = vunpack.c.l.b16 %v1390
    %v1577 = vunpack.c.h.b16 %v1390
    %v1578 = vunpack.c.l.b16 %v1391
    %v1579 = vunpack.c.h.b16 %v1391
    %v1580 = vunpack.c.l.b16 %v1392
    %v1581 = vunpack.c.h.b16 %v1392
    %v1582 = vunpack.c.l.b16 %v1393
    %v1583 = vunpack.c.h.b16 %v1393
    %v1584 = vunpack.c.l.b16 %v1394
    %v1585 = vunpack.c.h.b16 %v1394
    %v1586 = vunpack.c.l.b16 %v1395
    %v1587 = vunpack.c.h.b16 %v1395
    %v1588 = vunpack.c.l.b16 %v1396
    %v1589 = vunpack.c.h.b16 %v1396
    %v1590 = vunpack.c.l.b16 %v1397
    %v1591 = vunpack.c.h.b16 %v1397
    %v1592 = vunpack.c.l.b16 %v1398
    %v1593 = vunpack.c.h.b16 %v1398
    %v1594 = vunpack.c.l.b16 %v1399
    %v1595 = vunpack.c.h.b16 %v1399
    %v1596 = vunpack.c.l.b16 %v1400
    %v1597 = vunpack.c.h.b16 %v1400
    %v1598 = vunpack.c.l.b16 %v1401
    %v1599 = vunpack.c.h.b16 %v1401
    %v1600 = vunpack.c.l.b16 %v1402
    %v1601 = vunpack.c.h.b16 %v1402
    %v1602 = vunpack.c.l.b16 %v1403
    %v1603 = vunpack.c.h.b16 %v1403
    %v1604 = vunpack.c.l.b16 %v1404
    %v1605 = vunpack.c.h.b16 %v1404
    %v1606 = vunpack.c.l.b16 %v1405
    %v1607 = vunpack.c.h.b16 %v1405
    %v1608 = vunpack.c.l.b16 %v1406
    %v1609 = vunpack.c.h.b16 %v1406
    %v1610 = vunpack.c.l.b16 %v1407
    %v1611 = vunpack.c.h.b16 %v1407
    %v1612 = vpack.c.b16 %v1486, %v1484
    %v1613 = vpack.c.b16 %v1487, %v1485
    %v1614 = vpack.c.b16 %v1490, %v1488
    %v1615 = vpack.c.b16 %v1491, %v1489
    %v1616 = vpack.c.b16 %v1494, %v1492
    %v1617 = vpack.c.b16 %v1495, %v1493
    %v1618 = vpack.c.b16 %v1498, %v1496
    %v1619 = vpack.c.b16 %v1499, %v1497
    %v1620 = vpack.c.b16 %v1502, %v1500
    %v1621 = vpack.c.b16 %v1503, %v1501
    %v1622 = vpack.c.b16 %v1506, %v1504
    %v1623 = vpack.c.b16 %v1507, %v1505
    %v1624 = vpack.c.b16 %v1510, %v1508
    %v1625 = vpack.c.b16 %v1511, %v1509
    %v1626 = vpack.c.b16 %v1514, %v1512
    %v1627 = vpack.c.b16 %v1515, %v1513
    %v1628 = vpack.c.b16 %v1518, %v1516
    %v1629 = vpack.c.b16 %v1519, %v1517
    %v1630 = vpack.c.b16 %v1522, %v1520
    %v1631 = vpack.c.b16 %v1523, %v1521
    %v1632 = vpack.c.b16 %v1526, %v1524
    %v1633 = vpack.c.b16 %v1527, %v1525
    %v1634 = vpack.c.b16 %v1530, %v1528
    %v1635 = vpack.c.b16 %v1531, %v1529
    %v1636 = vpack.c.b16 %v1534, %v1532
    %v1637 = vpack.c.b16 %v1535, %v1533
    %v1638 = vpack.c.b16 %v1538, %v1536
    %v1639 = vpack.c.b16 %v1539, %v1537
    %v1640 = vpack.c.b16 %v1542, %v1540
    %v1641 = vpack.c.b16 %v1543, %v1541
    %v1642 = vpack.c.b16 %v1546, %v1544
    %v1643 = vpack.c.b16 %v1547, %v1545
    %v1644 = vpack.c.b16 %v1550, %v1548
    %v1645 = vpack.c.b16 %v1551, %v1549
    %v1646 = vpack.c.b16 %v1554, %v1552
    %v1647 = vpack.c.b16 %v1555, %v1553
    %v1648 = vpack.c.b16 %v1558, %v1556
    %v1649 = vpack.c.b16 %v1559, %v1557
    %v1650 = vpack.c.b16 %v1562, %v1560
    %v1651 = vpack.c.b16 %v1563, %v1561
    %v1652 = vpack.c.b16 %v1566, %v1564
    %v1653 = vpack.c.b16 %v1567, %v1565
    %v1654 = vpack.c.b16 %v1570, %v1568
    %v1655 = vpack.c.b16 %v1571, %v1569
    %v1656 = vpack.c.b16 %v1574, %v1572
    %v1657 = vpack.c.b16 %v1575, %v1573
    %v1658 = vpack.c.b16 %v1578, %v1576
    %v1659 = vpack.c.b16 %v1579, %v1577
    %v1660 = vpack.c.b16 %v1582, %v1580
    %v1661 = vpack.c.b16 %v1583, %v1581
    %v1662 = vpack.c.b16 %v1586, %v1584
    %v1663 = vpack.c.b16 %v1587, %v1585
    %v1664 = vpack.c.b16 %v1590, %v1588
    %v1665 = vpack.c.b16 %v1591, %v1589
    %v1666 = vpack.c.b16 %v1594, %v1592
    %v1667 = vpack.c.b16 %v1595, %v1593
    %v1668 = vpack.c.b16 %v1598, %v1596
    %v1669 = vpack.c.b16 %v1599, %v1597
    %v1670 = vpack.c.b16 %v1602, %v1600
    %v1671 = vpack.c.b16 %v1603, %v1601
    %v1672 = vpack.c.b16 %v1606, %v1604
    %v1673 = vpack.c.b16 %v1607, %v1605
    %v1674 = vpack.c.b16 %v1610, %v1608
    %v1675 = vpack.c.b16 %v1611, %v1609
    %1740 = vmatprep.subr.bf16.mxu0 %v1627
    %1741 = vmatpush1.bf16.msra.mxu0 %v1626
    %1742 = vmatprep.subr.bf16.mxu0 %v1625
    %1743 = vmatpush1.bf16.msra.mxu0 %v1624
    %1744 = vmatprep.subr.bf16.mxu0 %v1623
    %1745 = vmatpush1.bf16.msra.mxu0 %v1622
    %1746 = vmatprep.subr.bf16.mxu0 %v1621
    %1747 = vmatpush1.bf16.msra.mxu0 %v1620
    %1748 = vmatprep.subr.bf16.mxu0 %v1619
    %1749 = vmatpush1.bf16.msra.mxu0 %v1618
    %1750 = vmatprep.subr.bf16.mxu0 %v1617
    %1751 = vmatpush1.bf16.msra.mxu0 %v1616
    %1752 = vmatprep.subr.bf16.mxu0 %v1615
    %1753 = vmatpush1.bf16.msra.mxu0 %v1614
    %1754 = vmatprep.subr.bf16.mxu0 %v1613
    %1755 = vmatpush1.bf16.msra.mxu0 %v1612
    %1756 = vmatprep.subr.bf16.mxu0 %v1643
    %1757 = vmatpush2.bf16.msra.mxu0 %v1642
    %1758 = vmatprep.subr.bf16.mxu0 %v1641
    %1759 = vmatpush2.bf16.msra.mxu0 %v1640
    %1760 = vmatprep.subr.bf16.mxu0 %v1639
    %1761 = vmatpush2.bf16.msra.mxu0 %v1638
    %1762 = vmatprep.subr.bf16.mxu0 %v1637
    %1763 = vmatpush2.bf16.msra.mxu0 %v1636
    %1764 = vmatprep.subr.bf16.mxu0 %v1635
    %1765 = vmatpush2.bf16.msra.mxu0 %v1634
    %1766 = vmatprep.subr.bf16.mxu0 %v1633
    %1767 = vmatpush2.bf16.msra.mxu0 %v1632
    %1768 = vmatprep.subr.bf16.mxu0 %v1631
    %1769 = vmatpush2.bf16.msra.mxu0 %v1630
    %1770 = vmatprep.subr.bf16.mxu0 %v1629
    %1771 = vmatpush2.bf16.msra.mxu0 %v1628
    %1772 = vmatprep.mubr.bf16.mxu0 %v1341
    %1773 = vmatmul.mubr.bf16.gmra.mxu0 %v1340
    %v1774 = vpop.f32.mrf.mxu0
    %v1775 = vadd.f32 %v1413, %v1774
    %v1776 = vpop.f32.mrf.mxu0
    %v1777 = vadd.f32 %v1417, %v1776
    %v1778 = vpop.f32.mrf.mxu0
    %v1779 = vadd.f32 %v1413, %v1778
    %v1780 = vpop.f32.mrf.mxu0
    %v1781 = vadd.f32 %v1417, %v1780
    %1782 = vdwg.mxu0
    %1783 = vmatprep.subr.bf16.mxu0 %v1659
    %1784 = vmatpush1.bf16.msra.mxu0 %v1658
    %1785 = vmatprep.subr.bf16.mxu0 %v1657
    %1786 = vmatpush1.bf16.msra.mxu0 %v1656
    %1787 = vmatprep.subr.bf16.mxu0 %v1655
    %1788 = vmatpush1.bf16.msra.mxu0 %v1654
    %1789 = vmatprep.subr.bf16.mxu0 %v1653
    %1790 = vmatpush1.bf16.msra.mxu0 %v1652
    %1791 = vmatprep.subr.bf16.mxu0 %v1651
    %1792 = vmatpush1.bf16.msra.mxu0 %v1650
    %1793 = vmatprep.subr.bf16.mxu0 %v1649
    %1794 = vmatpush1.bf16.msra.mxu0 %v1648
    %1795 = vmatprep.subr.bf16.mxu0 %v1647
    %1796 = vmatpush1.bf16.msra.mxu0 %v1646
    %1797 = vmatprep.subr.bf16.mxu0 %v1645
    %1798 = vmatpush1.bf16.msra.mxu0 %v1644
    %1799 = vmatprep.subr.bf16.mxu0 %v1675
    %1800 = vmatpush2.bf16.msra.mxu0 %v1674
    %1801 = vmatprep.subr.bf16.mxu0 %v1673
    %1802 = vmatpush2.bf16.msra.mxu0 %v1672
    %1803 = vmatprep.subr.bf16.mxu0 %v1671
    %1804 = vmatpush2.bf16.msra.mxu0 %v1670
    %1805 = vmatprep.subr.bf16.mxu0 %v1669
    %1806 = vmatpush2.bf16.msra.mxu0 %v1668
    %1807 = vmatprep.subr.bf16.mxu0 %v1667
    %1808 = vmatpush2.bf16.msra.mxu0 %v1666
    %1809 = vmatprep.subr.bf16.mxu0 %v1665
    %1810 = vmatpush2.bf16.msra.mxu0 %v1664
    %1811 = vmatprep.subr.bf16.mxu0 %v1663
    %1812 = vmatpush2.bf16.msra.mxu0 %v1662
    %1813 = vmatprep.subr.bf16.mxu0 %v1661
    %1814 = vmatpush2.bf16.msra.mxu0 %v1660
    %1815 = vmatprep.mubr.bf16.mxu0 %v1343
    %1816 = vmatmul.mubr.bf16.gmra.mxu0 %v1342
    %v1817 = vpop.f32.mrf.mxu0
    %v1818 = vadd.f32 %v1775, %v1817
    %v1819 = vpop.f32.mrf.mxu0
    %v1820 = vadd.f32 %v1777, %v1819
    %v1821 = vpop.f32.mrf.mxu0
    %v1822 = vadd.f32 %v1779, %v1821
    %v1823 = vpop.f32.mrf.mxu0
    %v1824 = vadd.f32 %v1781, %v1823
    %1825 = vdwg.mxu0
    %vm1826 = vcmp.ge.f32.partialorder %v1818, 0.0
    %vm1827 = vcmp.ge.f32.partialorder %v1820, 0.0
    %vm1828 = vcmp.ge.f32.partialorder %v1822, 0.0
    %vm1829 = vcmp.ge.f32.partialorder %v1824, 0.0
    %v1830 = vstv %s134
    %v1831 = vmul.f32 %v1830, %v1818
    %v1832 = vmul.f32 %v1830, %v1820
    %v1833 = vmul.f32 %v1830, %v1822
    %v1834 = vmul.f32 %v1830, %v1824
    %v1835 = vsel %vm1826, %v1818, %v1831
    %v1836 = vsel %vm1827, %v1820, %v1832
    %v1837 = vsel %vm1828, %v1822, %v1833
    %v1838 = vsel %vm1829, %v1824, %v1834
    %1839 = vst [vmem:[#allocation16] sm:$0xff] %v1012
    %1840 = vst [vmem:[#allocation16 + $0x8] sm:$0xff] %v1013
    %1841 = vst [vmem:[#allocation15] sm:$0xff] %v1835
    %1842 = vst [vmem:[#allocation15 + $0x8] sm:$0xff] %v1836
    %1843 = vst [vmem:[#allocation15 + $0x10] sm:$0xff] %v1837
    %1844 = vst [vmem:[#allocation15 + $0x18] sm:$0xff] %v1838
    // Predicated region
    $region70: #{ae_forward.1} parent=1 // pred_check
      _
    $region71: #{ae_forward.1} parent=1 // pred_check_branch
      %1846 = sbr.rel (0) target = $region73
    $region72: #{ae_forward.1} parent=1 // pred_region
      %s1848 = ssub.s32 512, 512
      %1849 = vsyncadd [#allocation4], %s1848
      %s1850 = sshll.u32 [#allocation15], 4
      %s1851 = int_to_ptr.vmem [resolvable:$true] %s1850
      %1856 = dma.vmem_to_hbm [thread:$0]  %s1851, 512, %s10, [#allocation4], 256, 256, 16
    $region73: #{ae_forward.1} parent=1 // pred_fallthru
      _
    // Predicated region
    $region74: #{ae_forward.1} parent=1 // pred_check
      _
    $region75: #{ae_forward.1} parent=1 // pred_check_branch
      %1858 = sbr.rel (0) target = $region77
    $region76: #{ae_forward.1} parent=1 // pred_region
      %s1860 = ssub.s32 256, 256
      %1861 = vsyncadd [#allocation17], %s1860
      %s1862 = sshll.u32 [#allocation16], 4
      %s1863 = int_to_ptr.vmem [resolvable:$true] %s1862
      %1868 = dma.vmem_to_hbm [thread:$0]  %s1863, 256, %s11, [#allocation17], 128, 128, 8
    $region77: #{ae_forward.1} parent=1 // pred_fallthru
      _
    // Predicated region
    $region78: #{ae_forward.1} parent=1 // pred_check
      _
    $region79: #{ae_forward.1} parent=1 // pred_check_branch
      %1870 = sbr.rel (0) target = $region81
    $region80: #{ae_forward.1} parent=1 // pred_region
      %1871 = dma.done [#allocation4], 512
    $region81: #{ae_forward.1} parent=1 // pred_fallthru
      _
    // Predicated region
    $region82: #{ae_forward.1} parent=1 // pred_check
      _
    $region83: #{ae_forward.1} parent=1 // pred_check_branch
      %1873 = sbr.rel (0) target = $region85
    $region84: #{ae_forward.1} parent=1 // pred_region
      %1874 = dma.done [#allocation17], 256
    $region85: #{ae_forward.1} parent=1 // pred_fallthru
      _
    %1875 = vsyncpa [#allocation3], 1
    %1876 = vsyncpa [#allocation8], 1
    %1877 = vsyncpa [#allocation11], 1
    %1878 = vsyncpa [#allocation14], 1
    %1879 = vsyncpa [#allocation4], 1
    %1880 = vsyncpa [#allocation17], 1
    %1881 = vsyncpa [#allocation5], 1

</llo_original>
